<compile_context>
chip_gen: v5e
topology: v5e:2x2
jax: 0.10.0
libtpu: 0.0.40
codegen_flags: <defaults>
</compile_context>

<pallas_src>
import math
from functools import partial

import numpy as np
from numpy.polynomial.polynomial import polyval

import jax
import jax.numpy as jnp
from jax import lax
from jax.experimental import pallas as pl
from jax.experimental.pallas import tpu as pltpu


# ----------------------------------------------------------------------------
# Hermite basis construction (plain numpy, identical semantics to the module)
# ----------------------------------------------------------------------------

def _gamma(x):
    return np.vectorize(math.gamma)(np.asarray(x, dtype=np.float64))


def hermcgen(mu, nu):
    """Generate coefficients of 2D Hermite functions."""
    nur = np.arange(nu + 1)
    num = _gamma(mu + nu + 1) * _gamma(nu + 1) * (-2.0) ** (nu - nur)
    denom = _gamma(mu + 1 + nur) * _gamma(1 + nur) * _gamma(nu + 1 - nur)
    return num / denom


def hermite_2d(N, npts, xvalmax=None):
    """Generate 2D Hermite function basis."""
    xvalmax = xvalmax or 2.5 * np.sqrt(N)
    ranks = range(N)
    xvalmax *= 1 - 1 / npts
    xvals = np.linspace(-xvalmax, xvalmax, npts, endpoint=True)[..., None]
    gxv = np.exp(-xvals ** 2 / 4)
    gaussian = np.dot(gxv, gxv.T)
    mu = np.array([])
    nu = np.array([])
    desc = []
    for i, rank in enumerate(ranks):
        muadd = np.sort(np.abs(np.arange(-rank, rank + 0.1, 2)))
        mu = np.hstack([mu, muadd])
        nu = np.hstack([nu, (rank - muadd) / 2])
        if not rank % 2:
            desc.append('z')
        desc += ['r', 'i'] * int(np.floor((rank + 1) / 2))
    theta = np.arctan2(xvals, xvals.T)
    radsq = xvals ** 2 + xvals.T ** 2
    nbases = mu.size
    H = np.zeros([nbases, npts, npts])
    for i, (mui, nui, desci) in enumerate(zip(mu, nu, desc)):
        radvals = polyval(radsq, hermcgen(mui, nui))
        basis = gaussian * radsq ** (mui / 2) * radvals * np.exp(1j * mui * theta)
        basis /= np.sqrt(
            2 ** (mui + 2 * nui) * np.pi
            * math.factorial(int(round(mui + nui)))
            * math.factorial(int(round(nui))))
        if desci == 'z':
            H[i] = basis.real / np.sqrt(2)
        elif desci == 'r':
            H[i] = basis.real
        elif desci == 'i':
            H[i] = basis.imag
    return (H / np.sqrt(np.sum(H ** 2, axis=(1, 2), keepdims=True)), desc, mu)


def rotation_matrix(desc, mu, angle):
    R = np.zeros((len(desc), len(desc)))
    for i, (d, m) in enumerate(zip(desc, mu)):
        if d == 'r':
            Rc = np.array([[np.cos(m * angle), np.sin(m * angle)],
                           [-np.sin(m * angle), np.cos(m * angle)]])
            R[i:i + 2, i:i + 2] = Rc
        elif d == 'z':
            R[i, i] = 1
    return R


def downsample_weights(weights, factor=2):
    w = 0
    for i in range(factor):
        for j in range(factor):
            w += weights[i::factor, j::factor]
    return w


def rotate_hermite(coeffs, H, Rs, num_rotations, first_layer):
    """numpy version of RotateHermite.forward."""
    num_coeffs, num_inputs_total, num_outputs = coeffs.shape
    num_inputs = num_inputs_total // num_rotations
    weights_rotated = []
    for i, R in enumerate(Rs):
        coeffs_rotated = np.tensordot(R, coeffs, axes=([1], [0]))
        w = np.tensordot(H, coeffs_rotated, axes=([0], [0]))
        if i and (not first_layer):
            shift = num_inputs_total - i * num_inputs
            w = np.concatenate([w[:, :, shift:, :], w[:, :, :shift, :]], axis=2)
        weights_rotated.append(w)
    return np.concatenate(weights_rotated, axis=3)


def build_hermite_conv_weights(coeffs, filter_size, upsampling, num_rotations,
                               first_layer):
    """HermiteConv2D weight precomputation -> OIHW weight (out_feat*rot, in, k, k)."""
    H, desc, mu = hermite_2d(filter_size, filter_size * upsampling,
                             2 * np.sqrt(filter_size))
    angles = [i * 2 * np.pi / num_rotations for i in range(num_rotations)]
    Rs = [rotation_matrix(desc, mu, a) for a in angles]
    w = rotate_hermite(coeffs, H, Rs, num_rotations, first_layer)
    w = downsample_weights(w, upsampling)            # (k, k, in, out*rot)
    w = np.transpose(w, (3, 2, 0, 1))                # (out*rot, in, k, k) == OIHW
    return w.astype(np.float32)


# ----------------------------------------------------------------------------
# One-time weight packing: OIHW -> per-kernel-row block-Toeplitz matmul operand
# (host NumPy; this is parameter setup, analogous to the module caching
# self.weights_all_rotations).  T[ky, X*CIN+c, ox*COUT+co] = w[co, c, ky, X-ox*s]
# for 0 <= X - ox*s < kw, else 0; K rows are padded to a multiple of 128.
# ----------------------------------------------------------------------------

def _round_up(x, m):
    return (x + m - 1) // m * m


def pack_toeplitz_weight(w_oihw, img_w, stride, padding):
    cout, cin, kh, kw = w_oihw.shape
    wp = img_w + 2 * padding
    ow = (img_w + 2 * padding - kw) // stride + 1
    k_pad = _round_up(wp * cin, 128)
    n_out = ow * cout
    w_hwio = np.transpose(w_oihw, (2, 3, 1, 0))      # (kh, kw, cin, cout)
    t = np.zeros((kh, k_pad, n_out), dtype=np.float32)
    for ky in range(kh):
        for ox in range(ow):
            for kx in range(kw):
                xcol = ox * stride + kx
                t[ky, xcol * cin:(xcol + 1) * cin,
                  ox * cout:(ox + 1) * cout] = w_hwio[ky, kx]
    return t


# ----------------------------------------------------------------------------
# Pallas kernel: fused zero-padding + kh lane-dense block-Toeplitz matmuls
# ----------------------------------------------------------------------------

def _conv_kernel(x_ref, t_ref, o_ref, xpad_ref, *,
                 nb, h, w, cin, kh, oh, stride, padding, k_pad, n_out):
    dt = xpad_ref.dtype
    wcin = w * cin
    lpad = padding * cin
    rpad = k_pad - lpad - wcin

    # --- materialize the zero-padded, lane-padded input rows in VMEM ---------
    # Every xpad element is written exactly once per grid step (no extra
    # full-buffer zero pass; no program_id gating, so it is correct even when
    # the "parallel" grid axis is split across TensorCores).
    if padding > 0:
        zrows = jnp.zeros((nb, padding, k_pad), dtype=dt)
        xpad_ref[:, pl.ds(0, padding), :] = zrows                      # top rows
        xpad_ref[:, pl.ds(padding + h, padding), :] = zrows            # bottom rows
    if lpad > 0:
        xpad_ref[:, pl.ds(padding, h), pl.ds(0, lpad)] = (
            jnp.zeros((nb, h, lpad), dtype=dt))                        # left lanes
    if rpad > 0:
        xpad_ref[:, pl.ds(padding, h), pl.ds(lpad + wcin, rpad)] = (
            jnp.zeros((nb, h, rpad), dtype=dt))                        # right + K-pad lanes
    xpad_ref[:, pl.ds(padding, h), pl.ds(lpad, wcin)] = x_ref[...].astype(dt)

    # --- kh MXU matmuls against the block-Toeplitz weight slabs --------------
    # LHS is a direct lane-dense slice of xpad (no im2col materialization);
    # operands are bf16, accumulation is f32 in registers.
    acc = jnp.zeros((nb * oh, n_out), dtype=jnp.float32)
    for ky in range(kh):
        if stride == 1:
            rows = xpad_ref[:, pl.ds(ky, oh), :]
        else:
            # TODO(synk): strided sublane slicing is an uncommon lowering path;
            # the demo exercises stride == 1 only.
            rows = xpad_ref[:, pl.ds(ky, oh, stride), :]
        lhs = rows.reshape(nb * oh, k_pad).astype(jnp.bfloat16)
        acc = acc + jnp.dot(lhs, t_ref[ky], preferred_element_type=jnp.float32)

    o_ref[...] = acc.reshape(nb, oh, n_out).astype(o_ref.dtype)


@partial(jax.jit, static_argnames=("cout", "kw", "stride", "padding", "batch_block"))
def hermite_conv2d(x_nchw, t_packed, *, cout, kw, stride, padding, batch_block=None):
    """conv2d(x, weights_all_rotations, bias=None, stride, padding) via Pallas."""
    n, cin, h, w = x_nchw.shape
    kh, k_pad, n_out = t_packed.shape
    oh = (h + 2 * padding - kh) // stride + 1
    ow = (w + 2 * padding - kw) // stride + 1
    hp = h + 2 * padding
    assert n_out == ow * cout
    assert k_pad >= (w + 2 * padding) * cin and k_pad % 128 == 0

    # >= 2 grid steps along a "parallel" axis by default (v7x megacore +
    # DMA/compute pipelining).
    nb = batch_block if batch_block is not None else max(1, n // 2)
    nb = max(1, min(nb, n))
    while n % nb:
        nb -= 1

    # NCHW -> (N, H, W*CIN): (W, CIN) folded onto the 128-lane axis.
    # TODO(synk): keep the surrounding model channels-last so this relayout
    # (and the inverse below) leave the hot path at production sizes.
    x_lanes = jnp.transpose(x_nchw, (0, 2, 3, 1)).reshape(n, h, w * cin)

    kernel = partial(_conv_kernel, nb=nb, h=h, w=w, cin=cin, kh=kh, oh=oh,
                     stride=stride, padding=padding, k_pad=k_pad, n_out=n_out)

    out = pl.pallas_call(
        kernel,
        out_shape=jax.ShapeDtypeStruct((n, oh, n_out), x_nchw.dtype),
        grid=(n // nb,),
        in_specs=[
            pl.BlockSpec((nb, h, w * cin), lambda b: (b, 0, 0)),
            pl.BlockSpec((kh, k_pad, n_out), lambda b: (0, 0, 0)),
        ],
        out_specs=pl.BlockSpec((nb, oh, n_out), lambda b: (b, 0, 0)),
        scratch_shapes=[
            pltpu.VMEM((nb, hp, k_pad), x_nchw.dtype),   # fused zero padding
        ],
        compiler_params=pltpu.CompilerParams(
            dimension_semantics=("parallel",),
            vmem_limit_bytes=32 * 1024 * 1024),
    )(x_lanes, t_packed)

    # (N, OH, OW*COUT) -> NCHW (module API).
    out = out.reshape(n, oh, ow, cout)
    return jnp.transpose(out, (0, 3, 1, 2))


# ----------------------------------------------------------------------------
# Main: build a small HermiteConv2D configuration and run it
# ----------------------------------------------------------------------------

if __name__ == "__main__":
    # Module configuration (small, non-first layer so the channel-shift path runs)
    filter_size = 5                     # -> n_coeffs = 15
    input_features = 8                  # = num_inputs (2) * num_rotations (4)
    output_features = 4
    num_rotations = 4
    upsampling = 2
    first_layer = False
    padding = 2
    stride = 1

    n_coeffs = filter_size * (filter_size + 1) // 2

    # Deterministic coefficient init (mirrors 0.01 * randn of the module).
    rng = np.random.default_rng(0)
    coeffs = (0.01 * rng.standard_normal(
        (n_coeffs, input_features, output_features))).astype(np.float32)

    # One-time weight construction (parameter setup, plain numpy).
    w_oihw_np = build_hermite_conv_weights(
        coeffs, filter_size, upsampling, num_rotations, first_layer)
    cout, cin, kh, kw = w_oihw_np.shape   # (16, 8, 5, 5)

    # Input (NCHW) — small deterministic example.
    key = jax.random.PRNGKey(0)
    n, h, w = 2, 16, 16
    x = jax.random.normal(key, (n, input_features, h, w), dtype=jnp.float32)

    # One-time packed weight (analogue of caching self.weights_all_rotations);
    # bf16 MXU operand, built on the host.
    t_np = pack_toeplitz_weight(w_oihw_np, img_w=w, stride=stride, padding=padding)
    t_packed = jnp.asarray(t_np).astype(jnp.bfloat16)

    # Run the Pallas kernel.
    out = hermite_conv2d(x, t_packed, cout=cout, kw=kw, stride=stride, padding=padding)
    out = jax.block_until_ready(out)

    # Reference 1 (tight): identical operand quantization (bf16 operands,
    # f32 accumulation), so only accumulation order differs.
    x_q = x.astype(jnp.bfloat16).astype(jnp.float32)
    w_q = jnp.asarray(w_oihw_np).astype(jnp.bfloat16).astype(jnp.float32)
    ref_q = lax.conv_general_dilated(
        x_q, w_q, window_strides=(stride, stride),
        padding=[(padding, padding), (padding, padding)],
        dimension_numbers=('NCHW', 'OIHW', 'NCHW'),
        precision=lax.Precision.HIGHEST)
    ref_q = jax.block_until_ready(ref_q)

    assert out.shape == ref_q.shape == (n, output_features * num_rotations, h, w)
    np.testing.assert_allclose(np.asarray(out), np.asarray(ref_q),
                               rtol=1e-3, atol=1e-5)

    # Reference 2 (module semantics, f32): tolerance relaxed for bf16 MXU operands.
    ref_f32 = lax.conv_general_dilated(
        x, jnp.asarray(w_oihw_np), window_strides=(stride, stride),
        padding=[(padding, padding), (padding, padding)],
        dimension_numbers=('NCHW', 'OIHW', 'NCHW'),
        precision=lax.Precision.HIGHEST)
    np.testing.assert_allclose(np.asarray(out), np.asarray(ref_f32),
                               rtol=2e-2, atol=5e-3)

    print("KERNEL_OK")
</pallas_src>

<mosaic_0001>
module attributes {stable_mosaic.version = 11 : i64} {
  func.func @_conv_kernel(%arg0: i32, %arg1: memref<1x16x128xf32, #tpu.memory_space<vmem>>, %arg2: memref<5x256x256xbf16, #tpu.memory_space<vmem>>, %arg3: memref<1x16x256xf32, #tpu.memory_space<vmem>>, %arg4: memref<1x20x256xf32, #tpu.memory_space<vmem>>) attributes {dimension_semantics = [#tpu.dimension_semantics<parallel>], iteration_bounds = array<i64: 2>, scalar_prefetch = 0 : i64, scratch_operands = 1 : i64, tpu.core_type = #tpu.core_type<tc>, window_params = [{transform_indices = @transform_0, window_bounds = array<i64: 1, 16, 128>}, {pipeline_mode = #tpu.pipeline_mode<synchronous>, transform_indices = @transform_1, window_bounds = array<i64: 5, 256, 256>}, {transform_indices = @transform_2, window_bounds = array<i64: 1, 16, 256>}]} {
    %cst = arith.constant 0.000000e+00 : f32
    %0 = vector.broadcast %cst : f32 to vector<1x2x256xf32>
    %c0 = arith.constant 0 : index
    %c0_0 = arith.constant 0 : index
    %c0_1 = arith.constant 0 : index
    %1 = vector.load %arg4[%c0, %c0_0, %c0_1] : memref<1x20x256xf32, #tpu.memory_space<vmem>>, vector<1x2x256xf32>
    tpu.vector_store %arg4[%c0, %c0_0, %c0_1], %0 {strides = array<i32>} : memref<1x20x256xf32, #tpu.memory_space<vmem>>, vector<1x2x256xf32>,
    %c0_2 = arith.constant 0 : index
    %c18 = arith.constant 18 : index
    %c0_3 = arith.constant 0 : index
    %2 = vector.load %arg4[%c0_2, %c18, %c0_3] : memref<1x20x256xf32, #tpu.memory_space<vmem>>, vector<1x2x256xf32>
    tpu.vector_store %arg4[%c0_2, %c18, %c0_3], %0 {strides = array<i32>} : memref<1x20x256xf32, #tpu.memory_space<vmem>>, vector<1x2x256xf32>,
    %cst_4 = arith.constant 0.000000e+00 : f32
    %3 = vector.broadcast %cst_4 : f32 to vector<1x16x16xf32>
    %c0_5 = arith.constant 0 : index
    %c2 = arith.constant 2 : index
    %c0_6 = arith.constant 0 : index
    %4 = vector.load %arg4[%c0_5, %c2, %c0_6] : memref<1x20x256xf32, #tpu.memory_space<vmem>>, vector<1x16x16xf32>
    tpu.vector_store %arg4[%c0_5, %c2, %c0_6], %3 {strides = array<i32>} : memref<1x20x256xf32, #tpu.memory_space<vmem>>, vector<1x16x16xf32>,
    %cst_7 = arith.constant 0.000000e+00 : f32
    %5 = vector.broadcast %cst_7 : f32 to vector<1x16x112xf32>
    %c0_8 = arith.constant 0 : index
    %c2_9 = arith.constant 2 : index
    %c144 = arith.constant 144 : index
    %6 = vector.load %arg4[%c0_8, %c2_9, %c144] : memref<1x20x256xf32, #tpu.memory_space<vmem>>, vector<1x16x112xf32>
    tpu.vector_store %arg4[%c0_8, %c2_9, %c144], %5 {strides = array<i32>} : memref<1x20x256xf32, #tpu.memory_space<vmem>>, vector<1x16x112xf32>,
    %c0_10 = arith.constant 0 : index
    %c0_11 = arith.constant 0 : index
    %c0_12 = arith.constant 0 : index
    %7 = vector.load %arg1[%c0_10, %c0_11, %c0_12] : memref<1x16x128xf32, #tpu.memory_space<vmem>>, vector<1x16x128xf32>
    %c0_13 = arith.constant 0 : index
    %c2_14 = arith.constant 2 : index
    %c16 = arith.constant 16 : index
    %8 = vector.load %arg4[%c0_13, %c2_14, %c16] : memref<1x20x256xf32, #tpu.memory_space<vmem>>, vector<1x16x128xf32>
    tpu.vector_store %arg4[%c0_13, %c2_14, %c16], %7 {strides = array<i32>} : memref<1x20x256xf32, #tpu.memory_space<vmem>>, vector<1x16x128xf32>,
    %cst_15 = arith.constant 0.000000e+00 : f32
    %9 = vector.broadcast %cst_15 : f32 to vector<16x256xf32>
    %c0_16 = arith.constant 0 : index
    %c0_17 = arith.constant 0 : index
    %c0_18 = arith.constant 0 : index
    %10 = vector.load %arg4[%c0_16, %c0_17, %c0_18] : memref<1x20x256xf32, #tpu.memory_space<vmem>>, vector<1x16x256xf32>
    %11 = vector.shape_cast %10 : vector<1x16x256xf32> to vector<16x256xf32>
    %12 = arith.truncf %11 : vector<16x256xf32> to vector<16x256xbf16>
    %c0_19 = arith.constant 0 : index
    %c0_20 = arith.constant 0 : index
    %c0_21 = arith.constant 0 : index
    %13 = vector.load %arg2[%c0_19, %c0_20, %c0_21] : memref<5x256x256xbf16, #tpu.memory_space<vmem>>, vector<1x256x256xbf16>
    %14 = vector.shape_cast %13 : vector<1x256x256xbf16> to vector<256x256xbf16>
    %cst_22 = arith.constant dense<0.000000e+00> : vector<16x256xf32>
    %15 = tpu.matmul %12, %14, %cst_22 {dimension_numbers = #tpu.dot_dimension_numbers<[1], [0], [0], [1], [0, 0, 1, 1], [], []>} : vector<16x256xbf16>, vector<256x256xbf16>, vector<16x256xf32> -> vector<16x256xf32>
    %16 = arith.addf %9, %15 : vector<16x256xf32>
    %c0_23 = arith.constant 0 : index
    %c1 = arith.constant 1 : index
    %c0_24 = arith.constant 0 : index
    %17 = vector.load %arg4[%c0_23, %c1, %c0_24] : memref<1x20x256xf32, #tpu.memory_space<vmem>>, vector<1x16x256xf32>
    %18 = vector.shape_cast %17 : vector<1x16x256xf32> to vector<16x256xf32>
    %19 = arith.truncf %18 : vector<16x256xf32> to vector<16x256xbf16>
    %c1_25 = arith.constant 1 : index
    %c0_26 = arith.constant 0 : index
    %c0_27 = arith.constant 0 : index
    %20 = vector.load %arg2[%c1_25, %c0_26, %c0_27] : memref<5x256x256xbf16, #tpu.memory_space<vmem>>, vector<1x256x256xbf16>
    %21 = vector.shape_cast %20 : vector<1x256x256xbf16> to vector<256x256xbf16>
    %cst_28 = arith.constant dense<0.000000e+00> : vector<16x256xf32>
    %22 = tpu.matmul %19, %21, %cst_28 {dimension_numbers = #tpu.dot_dimension_numbers<[1], [0], [0], [1], [0, 0, 1, 1], [], []>} : vector<16x256xbf16>, vector<256x256xbf16>, vector<16x256xf32> -> vector<16x256xf32>
    %23 = arith.addf %16, %22 : vector<16x256xf32>
    %c0_29 = arith.constant 0 : index
    %c2_30 = arith.constant 2 : index
    %c0_31 = arith.constant 0 : index
    %24 = vector.load %arg4[%c0_29, %c2_30, %c0_31] : memref<1x20x256xf32, #tpu.memory_space<vmem>>, vector<1x16x256xf32>
    %25 = vector.shape_cast %24 : vector<1x16x256xf32> to vector<16x256xf32>
    %26 = arith.truncf %25 : vector<16x256xf32> to vector<16x256xbf16>
    %c2_32 = arith.constant 2 : index
    %c0_33 = arith.constant 0 : index
    %c0_34 = arith.constant 0 : index
    %27 = vector.load %arg2[%c2_32, %c0_33, %c0_34] : memref<5x256x256xbf16, #tpu.memory_space<vmem>>, vector<1x256x256xbf16>
    %28 = vector.shape_cast %27 : vector<1x256x256xbf16> to vector<256x256xbf16>
    %cst_35 = arith.constant dense<0.000000e+00> : vector<16x256xf32>
    %29 = tpu.matmul %26, %28, %cst_35 {dimension_numbers = #tpu.dot_dimension_numbers<[1], [0], [0], [1], [0, 0, 1, 1], [], []>} : vector<16x256xbf16>, vector<256x256xbf16>, vector<16x256xf32> -> vector<16x256xf32>
    %30 = arith.addf %23, %29 : vector<16x256xf32>
    %c0_36 = arith.constant 0 : index
    %c3 = arith.constant 3 : index
    %c0_37 = arith.constant 0 : index
    %31 = vector.load %arg4[%c0_36, %c3, %c0_37] : memref<1x20x256xf32, #tpu.memory_space<vmem>>, vector<1x16x256xf32>
    %32 = vector.shape_cast %31 : vector<1x16x256xf32> to vector<16x256xf32>
    %33 = arith.truncf %32 : vector<16x256xf32> to vector<16x256xbf16>
    %c3_38 = arith.constant 3 : index
    %c0_39 = arith.constant 0 : index
    %c0_40 = arith.constant 0 : index
    %34 = vector.load %arg2[%c3_38, %c0_39, %c0_40] : memref<5x256x256xbf16, #tpu.memory_space<vmem>>, vector<1x256x256xbf16>
    %35 = vector.shape_cast %34 : vector<1x256x256xbf16> to vector<256x256xbf16>
    %cst_41 = arith.constant dense<0.000000e+00> : vector<16x256xf32>
    %36 = tpu.matmul %33, %35, %cst_41 {dimension_numbers = #tpu.dot_dimension_numbers<[1], [0], [0], [1], [0, 0, 1, 1], [], []>} : vector<16x256xbf16>, vector<256x256xbf16>, vector<16x256xf32> -> vector<16x256xf32>
    %37 = arith.addf %30, %36 : vector<16x256xf32>
    %c0_42 = arith.constant 0 : index
    %c4 = arith.constant 4 : index
    %c0_43 = arith.constant 0 : index
    %38 = vector.load %arg4[%c0_42, %c4, %c0_43] : memref<1x20x256xf32, #tpu.memory_space<vmem>>, vector<1x16x256xf32>
    %39 = vector.shape_cast %38 : vector<1x16x256xf32> to vector<16x256xf32>
    %40 = arith.truncf %39 : vector<16x256xf32> to vector<16x256xbf16>
    %c4_44 = arith.constant 4 : index
    %c0_45 = arith.constant 0 : index
    %c0_46 = arith.constant 0 : index
    %41 = vector.load %arg2[%c4_44, %c0_45, %c0_46] : memref<5x256x256xbf16, #tpu.memory_space<vmem>>, vector<1x256x256xbf16>
    %42 = vector.shape_cast %41 : vector<1x256x256xbf16> to vector<256x256xbf16>
    %cst_47 = arith.constant dense<0.000000e+00> : vector<16x256xf32>
    %43 = tpu.matmul %40, %42, %cst_47 {dimension_numbers = #tpu.dot_dimension_numbers<[1], [0], [0], [1], [0, 0, 1, 1], [], []>} : vector<16x256xbf16>, vector<256x256xbf16>, vector<16x256xf32> -> vector<16x256xf32>
    %44 = arith.addf %37, %43 : vector<16x256xf32>
    %45 = vector.shape_cast %44 : vector<16x256xf32> to vector<1x16x256xf32>
    %c0_48 = arith.constant 0 : index
    %c0_49 = arith.constant 0 : index
    %c0_50 = arith.constant 0 : index
    %46 = vector.load %arg3[%c0_48, %c0_49, %c0_50] : memref<1x16x256xf32, #tpu.memory_space<vmem>>, vector<1x16x256xf32>
    tpu.vector_store %arg3[%c0_48, %c0_49, %c0_50], %45 {strides = array<i32>} : memref<1x16x256xf32, #tpu.memory_space<vmem>>, vector<1x16x256xf32>,
    return
  }
  func.func @transform_0(%arg0: i32) -> (i32, i32, i32) {
    %c0_i32 = arith.constant 0 : i32
    %c0_i32_0 = arith.constant 0 : i32
    %c0_i32_1 = arith.constant 0 : i32
    return %arg0, %c0_i32, %c0_i32_0 : i32, i32, i32
  }
  func.func @transform_1(%arg0: i32) -> (i32, i32, i32) {
    %c0_i32 = arith.constant 0 : i32
    %c0_i32_0 = arith.constant 0 : i32
    %c0_i32_1 = arith.constant 0 : i32
    %c0_i32_2 = arith.constant 0 : i32
    return %c0_i32, %c0_i32_0, %c0_i32_1 : i32, i32, i32
  }
  func.func @transform_2(%arg0: i32) -> (i32, i32, i32) {
    %c0_i32 = arith.constant 0 : i32
    %c0_i32_0 = arith.constant 0 : i32
    %c0_i32_1 = arith.constant 0 : i32
    return %arg0, %c0_i32, %c0_i32_0 : i32, i32, i32
  }
}

</mosaic_0001>

<llo_original>
// kernel: hermite_conv2d.1
$region0: #{hermite_conv2d.1}
  #allocation0 [shape = 'u32[]', space=smem, size = 0x4, offset = 0x4, fixed_abs, tag = 'smem constant byte address 0x4 - core index']
  #allocation1 [shape = 'u32[72,128]{1,0:T(1,128)}', space=vmem, size = 0x9000, scoped, tag = 'internal scratch']
  #allocation2 [shape = 'f32[1,20,256]{2,1,0:T(8,128)}', space=vmem, size = 0x6000, scoped, tag = 'scratch operand']
  %s0 = inlined_call_operand.vmem [shape: f32[2,16,128], index: 0, kind: input, shape index: {}]
  %s1 = inlined_call_operand.hbm [shape: bf16[5,256,256], index: 1, kind: input, shape index: {}]
  %s2 = inlined_call_operand.vmem [shape: f32[2,16,256], index: 2, kind: output, shape index: {}]
  %s3 = sld [smem:[#allocation0]]
  $region45: #{hermite_conv2d.1} parent=0
    _
  %s5 = ssub.s32 1, %s3
  %s6 = scalar_select 0, %s5, %s3
  $region1: #{hermite_conv2d.1} parent=0
    #allocation3 [shape = 'u8[655360]{0}', space=vmem, size = 0xa0000, scoped, tag = 'input window, operand 1, single buffered']
    #allocation4 [shape = 's32[2]{0}', space=sflag, size = 0x8, scoped, tag = 'scoped memory for hermite_conv2d.1']
    %7 = vsyncpa [#allocation4], 0
    loop: start=0, step=1, limit=4
    $region2: #{hermite_conv2d.1} parent=1 // loop_pre_header
      _
    $region3: #{hermite_conv2d.1} parent=1 // loop_header
      %s9 = sphi 0, %s13
      %p10 = scmp.ge.s32.totalorder %s9, 4
      %s19 = sphi 0, %s21
      %s22 = sphi 0, %s19
      %s23 = sphi 0, %s22
      %s39 = sphi 0, %s23
      %s43 = sphi 0, %s43
      %s45 = sphi 0, %s43
      %s46 = sphi 0, %s45
      %s60 = sphi 0, %s46
      %s66 = sphi 0, %s68
      %s69 = sphi 0, %s66
      %s70 = sphi 0, %s69
      %s86 = sphi 0, %s70
    $region4: #{hermite_conv2d.1} parent=1 // loop_header_branch
      %12 = sbr.rel (%p10) target = $region8
    $region5: #{hermite_conv2d.1} parent=1 // loop_body
      %s14 = ssub.s32 %s9, 1
      %s15 = ssub.s32 %s9, 2
      %s16 = sadd.s32 %s9, 1
      %s17 = ssub.s32 %s9, %s16
      %p18 = scmp.eq.s32.totalorder %s17, 0
      %s20 = sadd.s32 %s19, 1
      %s21 = scalar_select %p18, %s19, %s20
      %p24 = pneg %p18
      %p25 = scmp.eq.s32.totalorder %s9, 1
      %p26 = por %p24, %p25
      %p27 = scmp.ne.s32.totalorder %s19, %s22
      %p28 = scmp.eq.s32.totalorder %s9, 0
      %p29 = por %p27, %p28
      %p30 = scmp.ne.s32.totalorder %s19, %s22
      %p31 = scmp.eq.s32.totalorder %s14, 1
      %p32 = por %p30, %p31
      %p33 = scmp.ne.s32.totalorder %s22, %s23
      %p34 = scmp.eq.s32.totalorder %s14, 0
      %p35 = por %p33, %p34
      %p36 = scmp.ne.s32.totalorder %s22, %s23
      %p37 = scmp.eq.s32.totalorder %s15, 1
      %p38 = por %p36, %p37
      %p40 = scmp.ne.s32.totalorder %s23, %s39
      %p41 = scmp.eq.s32.totalorder %s15, 0
      %p42 = por %p40, %p41
      %s44 = sadd.s32 %s43, 1
      %p47 = scmp.eq.s32.totalorder %s9, 1
      %p48 = scmp.ne.s32.totalorder %s43, %s45
      %p49 = scmp.eq.s32.totalorder %s9, 0
      %p50 = por %p48, %p49
      %p51 = scmp.ne.s32.totalorder %s43, %s45
      %p52 = scmp.eq.s32.totalorder %s14, 1
      %p53 = por %p51, %p52
      %p54 = scmp.ne.s32.totalorder %s45, %s46
      %p55 = scmp.eq.s32.totalorder %s14, 0
      %p56 = por %p54, %p55
      %p57 = scmp.ne.s32.totalorder %s45, %s46
      %p58 = scmp.eq.s32.totalorder %s15, 1
      %p59 = por %p57, %p58
      %p61 = scmp.ne.s32.totalorder %s46, %s60
      %p62 = scmp.eq.s32.totalorder %s15, 0
      %p63 = por %p61, %p62
      %s64 = ssub.s32 %s9, %s16
      %p65 = scmp.eq.s32.totalorder %s64, 0
      %s67 = sadd.s32 %s66, 1
      %s68 = scalar_select %p65, %s66, %s67
      %p71 = pneg %p65
      %p72 = scmp.eq.s32.totalorder %s9, 1
      %p73 = por %p71, %p72
      %p74 = scmp.ne.s32.totalorder %s66, %s69
      %p75 = scmp.eq.s32.totalorder %s9, 0
      %p76 = por %p74, %p75
      %p77 = scmp.ne.s32.totalorder %s66, %s69
      %p78 = scmp.eq.s32.totalorder %s14, 1
      %p79 = por %p77, %p78
      %p80 = scmp.ne.s32.totalorder %s69, %s70
      %p81 = scmp.eq.s32.totalorder %s14, 0
      %p82 = por %p80, %p81
      %p83 = scmp.ne.s32.totalorder %s69, %s70
      %p84 = scmp.eq.s32.totalorder %s15, 1
      %p85 = por %p83, %p84
      %p87 = scmp.ne.s32.totalorder %s70, %s86
      %p88 = scmp.eq.s32.totalorder %s15, 0
      %p89 = por %p87, %p88
      %p90 = scmp.le.s32.totalorder 1, %s9
      %p91 = scmp.lt.s32.totalorder %s9, 3
      %p92 = pnand %p90, %p91
      %p93 = pneg %p92
      // Predicated region
      $region9: #{hermite_conv2d.1} parent=5 // pred_check
        _
      $region10: #{hermite_conv2d.1} parent=5 // pred_check_branch
        %95 = sbr.rel (%p92) target = $region12
      $region11: #{hermite_conv2d.1} parent=5 // pred_region
        %s96 = ssub.s32 %s9, 1
        // Predicated region
        $region13: #{hermite_conv2d.1} parent=11 // pred_check
          %p97 = pneg %p56
        $region14: #{hermite_conv2d.1} parent=11 // pred_check_branch
          %99 = sbr.rel (%p97) target = $region16
        $region15: #{hermite_conv2d.1} parent=11 // pred_region
          %101 = vsyncadd [#allocation4], 0
          %s102 = sshll.u32 %s1, 4
          %s103 = int_to_ptr.hbm [resolvable:$true] %s102
          %s104 = sshll.u32 [#allocation3], 4
          %s105 = int_to_ptr.vmem [resolvable:$true] %s104
          %110 = dma.hbm_to_vmem [thread:$0]  %s103, 20480, %s105, [#allocation4], 128, 128, 8
        $region16: #{hermite_conv2d.1} parent=11 // pred_fallthru
          _
      $region12: #{hermite_conv2d.1} parent=5 // pred_fallthru
        _
      %p111 = scmp.lt.s32.totalorder %s9, 2
      // Predicated region
      $region17: #{hermite_conv2d.1} parent=5 // pred_check
        %p112 = pneg %p111
      $region18: #{hermite_conv2d.1} parent=5 // pred_check_branch
        %114 = sbr.rel (%p112) target = $region20
      $region19: #{hermite_conv2d.1} parent=5 // pred_region
        // Predicated region
        $region21: #{hermite_conv2d.1} parent=19 // pred_check
          %p115 = pneg %p29
        $region22: #{hermite_conv2d.1} parent=19 // pred_check_branch
          %117 = sbr.rel (%p115) target = $region24
        $region23: #{hermite_conv2d.1} parent=19 // pred_region
          %p118 = scmp.lt.s32.totalorder %s9, 1
          %s119 = scalar_select %p118, %s9, 1
          %s120 = smul.addr %s119, 2
          %s121 = smul.addr %s120, 8
          %s122 = scalar_lea.vmem %s0, %s121
        $region24: #{hermite_conv2d.1} parent=19 // pred_fallthru
          _
      $region20: #{hermite_conv2d.1} parent=5 // pred_fallthru
        _
      %p123 = scmp.le.s32.totalorder 1, %s9
      %p124 = scmp.lt.s32.totalorder %s9, 3
      %p125 = pnand %p123, %p124
      %p126 = pneg %p125
      // Predicated region
      $region25: #{hermite_conv2d.1} parent=5 // pred_check
        _
      $region26: #{hermite_conv2d.1} parent=5 // pred_check_branch
        %128 = sbr.rel (%p125) target = $region28
      $region27: #{hermite_conv2d.1} parent=5 // pred_region
        %s129 = ssub.s32 %s9, 1
        // Predicated region
        $region29: #{hermite_conv2d.1} parent=27 // pred_check
          %p130 = pneg %p56
        $region30: #{hermite_conv2d.1} parent=27 // pred_check_branch
          %132 = sbr.rel (%p130) target = $region32
        $region31: #{hermite_conv2d.1} parent=27 // pred_region
          %134 = dma.done [#allocation4], 20480
        $region32: #{hermite_conv2d.1} parent=27 // pred_fallthru
          _
        %p135 = scmp.lt.s32.totalorder %s14, 1
        %s136 = scalar_select %p135, %s14, 1
        %s137 = smul.addr %s136, 2
        %s138 = smul.addr %s137, 8
        %s139 = scalar_lea.vmem %s0, %s138
        %p140 = pneg %p35
        %p141 = pneg %p32
        %p142 = pneg %p56
        %p143 = pneg %p53
        %p144 = pneg %p82
        %p145 = pneg %p79
        %p146 = scmp.lt.s32.totalorder %s14, 1
        %s147 = scalar_select %p146, %s14, 1
        %s148 = smul.addr %s147, 4
        %s149 = smul.addr %s148, 8
        %s150 = scalar_lea.vmem %s2, %s149
        %p151 = scmp.lt.s32.totalorder %s14, 1
        %s152 = scalar_select %p151, %s14, 1
        %s153 = smul.addr %s152, 2
        %s154 = smul.addr %s153, 8
        %s155 = scalar_lea.vmem %s0, %s154
        %p156 = scmp.lt.s32.totalorder %s14, 1
        %s157 = scalar_select %p156, %s14, 1
        %s158 = smul.addr %s157, 4
        %s159 = smul.addr %s158, 8
        %s160 = scalar_lea.vmem %s2, %s159
        %161 = vst [vmem:[#allocation2] sm:$0x3] 0.0
        %162 = vst [vmem:[#allocation2 + $0x8] sm:$0x3] 0.0
        %163 = vst [vmem:[#allocation2 + $0x20] sm:$0xc] 0.0
        %164 = vst [vmem:[#allocation2 + $0x28] sm:$0xc] 0.0
        %vm165 = vcmask 130050
        %166 = vst.msk [vmem:[#allocation2] sm:$0xfc] %vm165, 0.0
        %vm167 = vcmask 130048
        %168 = vst.msk [vmem:[#allocation2 + $0x10] sm:$0xff] %vm167, 0.0
        %vm169 = vcmask 123904
        %170 = vst.msk [vmem:[#allocation2 + $0x20] sm:$0x3] %vm169, 0.0
        %vm171 = vcmask 1047682
        %172 = vst.msk [vmem:[#allocation2 + $0x8] sm:$0xfc] %vm171, 0.0
        %vm173 = vcmask 1047680
        %174 = vst.msk [vmem:[#allocation2 + $0x18] sm:$0xff] %vm173, 0.0
        %vm175 = vcmask 1041536
        %176 = vst.msk [vmem:[#allocation2 + $0x28] sm:$0x3] %vm175, 0.0
        %v177 = vld [vmem:[%s155] sm:$0xff]
        %v178 = vld [vmem:[%s155 + $0x8] sm:$0xff]
        %vm181 = vcmask 1041408
        %v182 = vrot.slane %v177, 6
        %v183 = vrot.slane %v178, 6
        %v184 = vsel %vm181, %v182, %v183
        %185 = vrot.lane.b32.xlu0 %v182, 16
        %v186 = vpop.permute.xlu0 %185
        %187 = vrot.lane.b32.xlu0 %v184, 16
        %v188 = vpop.permute.xlu0 %187
        %189 = vrot.lane.b32.xlu0 %v183, 16
        %v190 = vpop.permute.xlu0 %189
        %194 = vst.msk [vmem:[#allocation2] sm:$0xfc] %vm171, %v186
        %195 = vst.msk [vmem:[#allocation2 + $0x8] sm:$0xfc] %vm165, %v186
        %196 = vst.msk [vmem:[#allocation2 + $0x10] sm:$0xff] %vm173, %v188
        %197 = vst.msk [vmem:[#allocation2 + $0x18] sm:$0xff] %vm167, %v188
        %198 = vst.msk [vmem:[#allocation2 + $0x20] sm:$0x3] %vm175, %v190
        %199 = vst.msk [vmem:[#allocation2 + $0x28] sm:$0x3] %vm169, %v190
        %v200 = vld [vmem:[#allocation2] sm:$0xff]
        %v201 = vld [vmem:[#allocation2 + $0x8] sm:$0xff]
        %v202 = vld [vmem:[#allocation2 + $0x10] sm:$0xff]
        %v203 = vld [vmem:[#allocation2 + $0x18] sm:$0xff]
        %v204 = vpack.c.bf16 %v202, %v200
        %v205 = vpack.c.bf16 %v203, %v201
        %v206 = vld [vmem:[#allocation3] sm:$0xff]
        %v207 = vld [vmem:[#allocation3 + $0x8] sm:$0xff]
        %v208 = vld [vmem:[#allocation3 + $0x10] sm:$0xff]
        %v209 = vld [vmem:[#allocation3 + $0x18] sm:$0xff]
        %v210 = vld [vmem:[#allocation3 + $0x20] sm:$0xff]
        %v211 = vld [vmem:[#allocation3 + $0x28] sm:$0xff]
        %v212 = vld [vmem:[#allocation3 + $0x30] sm:$0xff]
        %v213 = vld [vmem:[#allocation3 + $0x38] sm:$0xff]
        %v214 = vld [vmem:[#allocation3 + $0x40] sm:$0xff]
        %v215 = vld [vmem:[#allocation3 + $0x48] sm:$0xff]
        %v216 = vld [vmem:[#allocation3 + $0x50] sm:$0xff]
        %v217 = vld [vmem:[#allocation3 + $0x58] sm:$0xff]
        %v218 = vld [vmem:[#allocation3 + $0x60] sm:$0xff]
        %v219 = vld [vmem:[#allocation3 + $0x68] sm:$0xff]
        %v220 = vld [vmem:[#allocation3 + $0x70] sm:$0xff]
        %v221 = vld [vmem:[#allocation3 + $0x78] sm:$0xff]
        %v222 = vld [vmem:[#allocation3 + $0x80] sm:$0xff]
        %v223 = vld [vmem:[#allocation3 + $0x88] sm:$0xff]
        %v224 = vld [vmem:[#allocation3 + $0x90] sm:$0xff]
        %v225 = vld [vmem:[#allocation3 + $0x98] sm:$0xff]
        %v226 = vld [vmem:[#allocation3 + $0xa0] sm:$0xff]
        %v227 = vld [vmem:[#allocation3 + $0xa8] sm:$0xff]
        %v228 = vld [vmem:[#allocation3 + $0xb0] sm:$0xff]
        %v229 = vld [vmem:[#allocation3 + $0xb8] sm:$0xff]
        %v230 = vld [vmem:[#allocation3 + $0xc0] sm:$0xff]
        %v231 = vld [vmem:[#allocation3 + $0xc8] sm:$0xff]
        %v232 = vld [vmem:[#allocation3 + $0xd0] sm:$0xff]
        %v233 = vld [vmem:[#allocation3 + $0xd8] sm:$0xff]
        %v234 = vld [vmem:[#allocation3 + $0xe0] sm:$0xff]
        %v235 = vld [vmem:[#allocation3 + $0xe8] sm:$0xff]
        %v236 = vld [vmem:[#allocation3 + $0xf0] sm:$0xff]
        %v237 = vld [vmem:[#allocation3 + $0xf8] sm:$0xff]
        %v238 = vld [vmem:[#allocation2] sm:$0xfe]
        %v239 = vld [vmem:[#allocation2 + $0x8] sm:$0xfe]
        %v240 = vld [vmem:[#allocation2 + $0x20] sm:$0x1]
        %v241 = vld [vmem:[#allocation2 + $0x28] sm:$0x1]
        %v242 = vpack.c.bf16 %v202, %v238
        %v243 = vpack.c.bf16 %v203, %v239
        %v244 = vpack.c.bf16 %v240, %v240
        %v245 = vpack.c.bf16 %v241, %v241
        %s246 = scalar_lea.vmem [#allocation3], 256
        %v247 = vld [vmem:[%s246] sm:$0xff]
        %v248 = vld [vmem:[%s246 + $0x8] sm:$0xff]
        %v249 = vld [vmem:[%s246 + $0x10] sm:$0xff]
        %v250 = vld [vmem:[%s246 + $0x18] sm:$0xff]
        %v251 = vld [vmem:[%s246 + $0x20] sm:$0xff]
        %v252 = vld [vmem:[%s246 + $0x28] sm:$0xff]
        %v253 = vld [vmem:[%s246 + $0x30] sm:$0xff]
        %v254 = vld [vmem:[%s246 + $0x38] sm:$0xff]
        %v255 = vld [vmem:[%s246 + $0x40] sm:$0xff]
        %v256 = vld [vmem:[%s246 + $0x48] sm:$0xff]
        %v257 = vld [vmem:[%s246 + $0x50] sm:$0xff]
        %v258 = vld [vmem:[%s246 + $0x58] sm:$0xff]
        %v259 = vld [vmem:[%s246 + $0x60] sm:$0xff]
        %v260 = vld [vmem:[%s246 + $0x68] sm:$0xff]
        %v261 = vld [vmem:[%s246 + $0x70] sm:$0xff]
        %v262 = vld [vmem:[%s246 + $0x78] sm:$0xff]
        %v263 = vld [vmem:[%s246 + $0x80] sm:$0xff]
        %v264 = vld [vmem:[%s246 + $0x88] sm:$0xff]
        %v265 = vld [vmem:[%s246 + $0x90] sm:$0xff]
        %v266 = vld [vmem:[%s246 + $0x98] sm:$0xff]
        %v267 = vld [vmem:[%s246 + $0xa0] sm:$0xff]
        %v268 = vld [vmem:[%s246 + $0xa8] sm:$0xff]
        %v269 = vld [vmem:[%s246 + $0xb0] sm:$0xff]
        %v270 = vld [vmem:[%s246 + $0xb8] sm:$0xff]
        %v271 = vld [vmem:[%s246 + $0xc0] sm:$0xff]
        %v272 = vld [vmem:[%s246 + $0xc8] sm:$0xff]
        %v273 = vld [vmem:[%s246 + $0xd0] sm:$0xff]
        %v274 = vld [vmem:[%s246 + $0xd8] sm:$0xff]
        %v275 = vld [vmem:[%s246 + $0xe0] sm:$0xff]
        %v276 = vld [vmem:[%s246 + $0xe8] sm:$0xff]
        %v277 = vld [vmem:[%s246 + $0xf0] sm:$0xff]
        %v278 = vld [vmem:[%s246 + $0xf8] sm:$0xff]
        %vm279 = vsmask.f32 7424
        %v281 = vshrl.u32 %v242, 16
        %v283 = vshll.u32 %v242, 16
        %v285 = vrot.slane %v283, 1
        %v286 = vor.u32 %v281, %v285
        %v288 = vshll.u32 %v244, 16
        %v290 = vrot.slane %v288, 1
        %v291 = vsel %vm279, %v286, %v290
        %v293 = vshrl.u32 %v243, 16
        %v295 = vshll.u32 %v243, 16
        %v297 = vrot.slane %v295, 1
        %v298 = vor.u32 %v293, %v297
        %v300 = vshll.u32 %v245, 16
        %v302 = vrot.slane %v300, 1
        %v303 = vsel %vm279, %v298, %v302
        %v338 = vunpack.c.l.b16 %v247
        %v339 = vunpack.c.h.b16 %v247
        %v340 = vunpack.c.l.b16 %v248
        %v341 = vunpack.c.h.b16 %v248
        %v342 = vunpack.c.l.b16 %v249
        %v343 = vunpack.c.h.b16 %v249
        %v344 = vunpack.c.l.b16 %v250
        %v345 = vunpack.c.h.b16 %v250
        %v346 = vunpack.c.l.b16 %v251
        %v347 = vunpack.c.h.b16 %v251
        %v348 = vunpack.c.l.b16 %v252
        %v349 = vunpack.c.h.b16 %v252
        %v350 = vunpack.c.l.b16 %v253
        %v351 = vunpack.c.h.b16 %v253
        %v352 = vunpack.c.l.b16 %v254
        %v353 = vunpack.c.h.b16 %v254
        %v354 = vunpack.c.l.b16 %v255
        %v355 = vunpack.c.h.b16 %v255
        %v356 = vunpack.c.l.b16 %v256
        %v357 = vunpack.c.h.b16 %v256
        %v358 = vunpack.c.l.b16 %v257
        %v359 = vunpack.c.h.b16 %v257
        %v360 = vunpack.c.l.b16 %v258
        %v361 = vunpack.c.h.b16 %v258
        %v362 = vunpack.c.l.b16 %v259
        %v363 = vunpack.c.h.b16 %v259
        %v364 = vunpack.c.l.b16 %v260
        %v365 = vunpack.c.h.b16 %v260
        %v366 = vunpack.c.l.b16 %v261
        %v367 = vunpack.c.h.b16 %v261
        %v368 = vunpack.c.l.b16 %v262
        %v369 = vunpack.c.h.b16 %v262
        %v370 = vunpack.c.l.b16 %v263
        %v371 = vunpack.c.h.b16 %v263
        %v372 = vunpack.c.l.b16 %v264
        %v373 = vunpack.c.h.b16 %v264
        %v374 = vunpack.c.l.b16 %v265
        %v375 = vunpack.c.h.b16 %v265
        %v376 = vunpack.c.l.b16 %v266
        %v377 = vunpack.c.h.b16 %v266
        %v378 = vunpack.c.l.b16 %v267
        %v379 = vunpack.c.h.b16 %v267
        %v380 = vunpack.c.l.b16 %v268
        %v381 = vunpack.c.h.b16 %v268
        %v382 = vunpack.c.l.b16 %v269
        %v383 = vunpack.c.h.b16 %v269
        %v384 = vunpack.c.l.b16 %v270
        %v385 = vunpack.c.h.b16 %v270
        %v386 = vunpack.c.l.b16 %v271
        %v387 = vunpack.c.h.b16 %v271
        %v388 = vunpack.c.l.b16 %v272
        %v389 = vunpack.c.h.b16 %v272
        %v390 = vunpack.c.l.b16 %v273
        %v391 = vunpack.c.h.b16 %v273
        %v392 = vunpack.c.l.b16 %v274
        %v393 = vunpack.c.h.b16 %v274
        %v394 = vunpack.c.l.b16 %v275
        %v395 = vunpack.c.h.b16 %v275
        %v396 = vunpack.c.l.b16 %v276
        %v397 = vunpack.c.h.b16 %v276
        %v398 = vunpack.c.l.b16 %v277
        %v399 = vunpack.c.h.b16 %v277
        %v400 = vunpack.c.l.b16 %v278
        %v401 = vunpack.c.h.b16 %v278
        %v402 = vpack.c.b16 %v340, %v338
        %v403 = vpack.c.b16 %v341, %v339
        %v404 = vpack.c.b16 %v344, %v342
        %v405 = vpack.c.b16 %v345, %v343
        %v406 = vpack.c.b16 %v348, %v346
        %v407 = vpack.c.b16 %v349, %v347
        %v408 = vpack.c.b16 %v352, %v350
        %v409 = vpack.c.b16 %v353, %v351
        %v410 = vpack.c.b16 %v356, %v354
        %v411 = vpack.c.b16 %v357, %v355
        %v412 = vpack.c.b16 %v360, %v358
        %v413 = vpack.c.b16 %v361, %v359
        %v414 = vpack.c.b16 %v364, %v362
        %v415 = vpack.c.b16 %v365, %v363
        %v416 = vpack.c.b16 %v368, %v366
        %v417 = vpack.c.b16 %v369, %v367
        %v418 = vpack.c.b16 %v372, %v370
        %v419 = vpack.c.b16 %v373, %v371
        %v420 = vpack.c.b16 %v376, %v374
        %v421 = vpack.c.b16 %v377, %v375
        %v422 = vpack.c.b16 %v380, %v378
        %v423 = vpack.c.b16 %v381, %v379
        %v424 = vpack.c.b16 %v384, %v382
        %v425 = vpack.c.b16 %v385, %v383
        %v426 = vpack.c.b16 %v388, %v386
        %v427 = vpack.c.b16 %v389, %v387
        %v428 = vpack.c.b16 %v392, %v390
        %v429 = vpack.c.b16 %v393, %v391
        %v430 = vpack.c.b16 %v396, %v394
        %v431 = vpack.c.b16 %v397, %v395
        %v432 = vpack.c.b16 %v400, %v398
        %v433 = vpack.c.b16 %v401, %v399
        %466 = vmatpush.bf16.msra.mxu0 %v416
        %467 = vmatpush.bf16.msra.mxu0 %v414
        %468 = vmatpush.bf16.msra.mxu0 %v412
        %469 = vmatpush.bf16.msra.mxu0 %v410
        %470 = vmatpush.bf16.msra.mxu0 %v408
        %471 = vmatpush.bf16.msra.mxu0 %v406
        %472 = vmatpush.bf16.msra.mxu0 %v404
        %473 = vmatpush.bf16.msra.mxu0 %v402
        %474 = vmatmul.bf16.gmra.mxu0 %v291
        %v475 = vpop.f32.mrf.mxu0
        %v476 = vadd.f32 0.0, %v475
        %v477 = vpop.f32.mrf.mxu0
        %v478 = vadd.f32 0.0, %v477
        %479 = vdwg.mxu0
        %480 = vmatpush.bf16.msra.mxu0 %v432
        %481 = vmatpush.bf16.msra.mxu0 %v430
        %482 = vmatpush.bf16.msra.mxu0 %v428
        %483 = vmatpush.bf16.msra.mxu0 %v426
        %484 = vmatpush.bf16.msra.mxu0 %v424
        %485 = vmatpush.bf16.msra.mxu0 %v422
        %486 = vmatpush.bf16.msra.mxu0 %v420
        %487 = vmatpush.bf16.msra.mxu0 %v418
        %488 = vmatmul.bf16.gmra.mxu0 %v303
        %v489 = vpop.f32.mrf.mxu0
        %v490 = vadd.f32 %v476, %v489
        %v491 = vpop.f32.mrf.mxu0
        %v492 = vadd.f32 %v478, %v491
        %493 = vdwg.mxu0
        %494 = vmatpush.bf16.msra.mxu0 %v417
        %495 = vmatpush.bf16.msra.mxu0 %v415
        %496 = vmatpush.bf16.msra.mxu0 %v413
        %497 = vmatpush.bf16.msra.mxu0 %v411
        %498 = vmatpush.bf16.msra.mxu0 %v409
        %499 = vmatpush.bf16.msra.mxu0 %v407
        %500 = vmatpush.bf16.msra.mxu0 %v405
        %501 = vmatpush.bf16.msra.mxu0 %v403
        %502 = vmatmul.bf16.gmra.mxu0 %v291
        %v503 = vpop.f32.mrf.mxu0
        %v504 = vadd.f32 0.0, %v503
        %v505 = vpop.f32.mrf.mxu0
        %v506 = vadd.f32 0.0, %v505
        %507 = vdwg.mxu0
        %508 = vmatpush.bf16.msra.mxu0 %v433
        %509 = vmatpush.bf16.msra.mxu0 %v431
        %510 = vmatpush.bf16.msra.mxu0 %v429
        %511 = vmatpush.bf16.msra.mxu0 %v427
        %512 = vmatpush.bf16.msra.mxu0 %v425
        %513 = vmatpush.bf16.msra.mxu0 %v423
        %514 = vmatpush.bf16.msra.mxu0 %v421
        %515 = vmatpush.bf16.msra.mxu0 %v419
        %516 = vmatmul.bf16.gmra.mxu0 %v303
        %v517 = vpop.f32.mrf.mxu0
        %v518 = vadd.f32 %v504, %v517
        %v519 = vpop.f32.mrf.mxu0
        %v520 = vadd.f32 %v506, %v519
        %521 = vdwg.mxu0
        %v554 = vunpack.c.l.b16 %v206
        %v555 = vunpack.c.h.b16 %v206
        %v556 = vunpack.c.l.b16 %v207
        %v557 = vunpack.c.h.b16 %v207
        %v558 = vunpack.c.l.b16 %v208
        %v559 = vunpack.c.h.b16 %v208
        %v560 = vunpack.c.l.b16 %v209
        %v561 = vunpack.c.h.b16 %v209
        %v562 = vunpack.c.l.b16 %v210
        %v563 = vunpack.c.h.b16 %v210
        %v564 = vunpack.c.l.b16 %v211
        %v565 = vunpack.c.h.b16 %v211
        %v566 = vunpack.c.l.b16 %v212
        %v567 = vunpack.c.h.b16 %v212
        %v568 = vunpack.c.l.b16 %v213
        %v569 = vunpack.c.h.b16 %v213
        %v570 = vunpack.c.l.b16 %v214
        %v571 = vunpack.c.h.b16 %v214
        %v572 = vunpack.c.l.b16 %v215
        %v573 = vunpack.c.h.b16 %v215
        %v574 = vunpack.c.l.b16 %v216
        %v575 = vunpack.c.h.b16 %v216
        %v576 = vunpack.c.l.b16 %v217
        %v577 = vunpack.c.h.b16 %v217
        %v578 = vunpack.c.l.b16 %v218
        %v579 = vunpack.c.h.b16 %v218
        %v580 = vunpack.c.l.b16 %v219
        %v581 = vunpack.c.h.b16 %v219
        %v582 = vunpack.c.l.b16 %v220
        %v583 = vunpack.c.h.b16 %v220
        %v584 = vunpack.c.l.b16 %v221
        %v585 = vunpack.c.h.b16 %v221
        %v586 = vunpack.c.l.b16 %v222
        %v587 = vunpack.c.h.b16 %v222
        %v588 = vunpack.c.l.b16 %v223
        %v589 = vunpack.c.h.b16 %v223
        %v590 = vunpack.c.l.b16 %v224
        %v591 = vunpack.c.h.b16 %v224
        %v592 = vunpack.c.l.b16 %v225
        %v593 = vunpack.c.h.b16 %v225
        %v594 = vunpack.c.l.b16 %v226
        %v595 = vunpack.c.h.b16 %v226
        %v596 = vunpack.c.l.b16 %v227
        %v597 = vunpack.c.h.b16 %v227
        %v598 = vunpack.c.l.b16 %v228
        %v599 = vunpack.c.h.b16 %v228
        %v600 = vunpack.c.l.b16 %v229
        %v601 = vunpack.c.h.b16 %v229
        %v602 = vunpack.c.l.b16 %v230
        %v603 = vunpack.c.h.b16 %v230
        %v604 = vunpack.c.l.b16 %v231
        %v605 = vunpack.c.h.b16 %v231
        %v606 = vunpack.c.l.b16 %v232
        %v607 = vunpack.c.h.b16 %v232
        %v608 = vunpack.c.l.b16 %v233
        %v609 = vunpack.c.h.b16 %v233
        %v610 = vunpack.c.l.b16 %v234
        %v611 = vunpack.c.h.b16 %v234
        %v612 = vunpack.c.l.b16 %v235
        %v613 = vunpack.c.h.b16 %v235
        %v614 = vunpack.c.l.b16 %v236
        %v615 = vunpack.c.h.b16 %v236
        %v616 = vunpack.c.l.b16 %v237
        %v617 = vunpack.c.h.b16 %v237
        %v618 = vpack.c.b16 %v556, %v554
        %v619 = vpack.c.b16 %v557, %v555
        %v620 = vpack.c.b16 %v560, %v558
        %v621 = vpack.c.b16 %v561, %v559
        %v622 = vpack.c.b16 %v564, %v562
        %v623 = vpack.c.b16 %v565, %v563
        %v624 = vpack.c.b16 %v568, %v566
        %v625 = vpack.c.b16 %v569, %v567
        %v626 = vpack.c.b16 %v572, %v570
        %v627 = vpack.c.b16 %v573, %v571
        %v628 = vpack.c.b16 %v576, %v574
        %v629 = vpack.c.b16 %v577, %v575
        %v630 = vpack.c.b16 %v580, %v578
        %v631 = vpack.c.b16 %v581, %v579
        %v632 = vpack.c.b16 %v584, %v582
        %v633 = vpack.c.b16 %v585, %v583
        %v634 = vpack.c.b16 %v588, %v586
        %v635 = vpack.c.b16 %v589, %v587
        %v636 = vpack.c.b16 %v592, %v590
        %v637 = vpack.c.b16 %v593, %v591
        %v638 = vpack.c.b16 %v596, %v594
        %v639 = vpack.c.b16 %v597, %v595
        %v640 = vpack.c.b16 %v600, %v598
        %v641 = vpack.c.b16 %v601, %v599
        %v642 = vpack.c.b16 %v604, %v602
        %v643 = vpack.c.b16 %v605, %v603
        %v644 = vpack.c.b16 %v608, %v606
        %v645 = vpack.c.b16 %v609, %v607
        %v646 = vpack.c.b16 %v612, %v610
        %v647 = vpack.c.b16 %v613, %v611
        %v648 = vpack.c.b16 %v616, %v614
        %v649 = vpack.c.b16 %v617, %v615
        %682 = vmatpush.bf16.msra.mxu0 %v632
        %683 = vmatpush.bf16.msra.mxu0 %v630
        %684 = vmatpush.bf16.msra.mxu0 %v628
        %685 = vmatpush.bf16.msra.mxu0 %v626
        %686 = vmatpush.bf16.msra.mxu0 %v624
        %687 = vmatpush.bf16.msra.mxu0 %v622
        %688 = vmatpush.bf16.msra.mxu0 %v620
        %689 = vmatpush.bf16.msra.mxu0 %v618
        %690 = vmatmul.bf16.gmra.mxu0 %v204
        %v691 = vpop.f32.mrf.mxu0
        %v692 = vadd.f32 %v490, %v691
        %v693 = vpop.f32.mrf.mxu0
        %v694 = vadd.f32 %v492, %v693
        %695 = vdwg.mxu0
        %696 = vmatpush.bf16.msra.mxu0 %v648
        %697 = vmatpush.bf16.msra.mxu0 %v646
        %698 = vmatpush.bf16.msra.mxu0 %v644
        %699 = vmatpush.bf16.msra.mxu0 %v642
        %700 = vmatpush.bf16.msra.mxu0 %v640
        %701 = vmatpush.bf16.msra.mxu0 %v638
        %702 = vmatpush.bf16.msra.mxu0 %v636
        %703 = vmatpush.bf16.msra.mxu0 %v634
        %704 = vmatmul.bf16.gmra.mxu0 %v205
        %v705 = vpop.f32.mrf.mxu0
        %v706 = vadd.f32 %v692, %v705
        %v707 = vpop.f32.mrf.mxu0
        %v708 = vadd.f32 %v694, %v707
        %709 = vdwg.mxu0
        %710 = vmatpush.bf16.msra.mxu0 %v633
        %711 = vmatpush.bf16.msra.mxu0 %v631
        %712 = vmatpush.bf16.msra.mxu0 %v629
        %713 = vmatpush.bf16.msra.mxu0 %v627
        %714 = vmatpush.bf16.msra.mxu0 %v625
        %715 = vmatpush.bf16.msra.mxu0 %v623
        %716 = vmatpush.bf16.msra.mxu0 %v621
        %717 = vmatpush.bf16.msra.mxu0 %v619
        %718 = vmatmul.bf16.gmra.mxu0 %v204
        %v719 = vpop.f32.mrf.mxu0
        %v720 = vadd.f32 %v518, %v719
        %v721 = vpop.f32.mrf.mxu0
        %v722 = vadd.f32 %v520, %v721
        %723 = vdwg.mxu0
        %724 = vmatpush.bf16.msra.mxu0 %v649
        %725 = vmatpush.bf16.msra.mxu0 %v647
        %726 = vmatpush.bf16.msra.mxu0 %v645
        %727 = vmatpush.bf16.msra.mxu0 %v643
        %728 = vmatpush.bf16.msra.mxu0 %v641
        %729 = vmatpush.bf16.msra.mxu0 %v639
        %730 = vmatpush.bf16.msra.mxu0 %v637
        %731 = vmatpush.bf16.msra.mxu0 %v635
        %732 = vmatmul.bf16.gmra.mxu0 %v205
        %v733 = vpop.f32.mrf.mxu0
        %v734 = vadd.f32 %v720, %v733
        %v735 = vpop.f32.mrf.mxu0
        %v736 = vadd.f32 %v722, %v735
        %737 = vdwg.mxu0
        %v738 = vld [vmem:[#allocation2] sm:$0xfc]
        %v739 = vld [vmem:[#allocation2 + $0x8] sm:$0xfc]
        %v740 = vld [vmem:[#allocation2 + $0x20] sm:$0x3]
        %v741 = vld [vmem:[#allocation2 + $0x28] sm:$0x3]
        %v742 = vpack.c.bf16 %v202, %v738
        %v743 = vpack.c.bf16 %v203, %v739
        %v744 = vpack.c.bf16 %v740, %v740
        %v745 = vpack.c.bf16 %v741, %v741
        %s746 = scalar_lea.vmem [#allocation3], 512
        %v747 = vld [vmem:[%s746] sm:$0xff]
        %v748 = vld [vmem:[%s746 + $0x8] sm:$0xff]
        %v749 = vld [vmem:[%s746 + $0x10] sm:$0xff]
        %v750 = vld [vmem:[%s746 + $0x18] sm:$0xff]
        %v751 = vld [vmem:[%s746 + $0x20] sm:$0xff]
        %v752 = vld [vmem:[%s746 + $0x28] sm:$0xff]
        %v753 = vld [vmem:[%s746 + $0x30] sm:$0xff]
        %v754 = vld [vmem:[%s746 + $0x38] sm:$0xff]
        %v755 = vld [vmem:[%s746 + $0x40] sm:$0xff]
        %v756 = vld [vmem:[%s746 + $0x48] sm:$0xff]
        %v757 = vld [vmem:[%s746 + $0x50] sm:$0xff]
        %v758 = vld [vmem:[%s746 + $0x58] sm:$0xff]
        %v759 = vld [vmem:[%s746 + $0x60] sm:$0xff]
        %v760 = vld [vmem:[%s746 + $0x68] sm:$0xff]
        %v761 = vld [vmem:[%s746 + $0x70] sm:$0xff]
        %v762 = vld [vmem:[%s746 + $0x78] sm:$0xff]
        %v763 = vld [vmem:[%s746 + $0x80] sm:$0xff]
        %v764 = vld [vmem:[%s746 + $0x88] sm:$0xff]
        %v765 = vld [vmem:[%s746 + $0x90] sm:$0xff]
        %v766 = vld [vmem:[%s746 + $0x98] sm:$0xff]
        %v767 = vld [vmem:[%s746 + $0xa0] sm:$0xff]
        %v768 = vld [vmem:[%s746 + $0xa8] sm:$0xff]
        %v769 = vld [vmem:[%s746 + $0xb0] sm:$0xff]
        %v770 = vld [vmem:[%s746 + $0xb8] sm:$0xff]
        %v771 = vld [vmem:[%s746 + $0xc0] sm:$0xff]
        %v772 = vld [vmem:[%s746 + $0xc8] sm:$0xff]
        %v773 = vld [vmem:[%s746 + $0xd0] sm:$0xff]
        %v774 = vld [vmem:[%s746 + $0xd8] sm:$0xff]
        %v775 = vld [vmem:[%s746 + $0xe0] sm:$0xff]
        %v776 = vld [vmem:[%s746 + $0xe8] sm:$0xff]
        %v777 = vld [vmem:[%s746 + $0xf0] sm:$0xff]
        %v778 = vld [vmem:[%s746 + $0xf8] sm:$0xff]
        %vm783 = vcmask 1046528
        %v784 = vrot.slane %v742, 1
        %v785 = vrot.slane %v744, 1
        %v786 = vsel %vm783, %v784, %v785
        %v787 = vrot.slane %v743, 1
        %v788 = vrot.slane %v745, 1
        %v789 = vsel %vm783, %v787, %v788
        %v824 = vunpack.c.l.b16 %v747
        %v825 = vunpack.c.h.b16 %v747
        %v826 = vunpack.c.l.b16 %v748
        %v827 = vunpack.c.h.b16 %v748
        %v828 = vunpack.c.l.b16 %v749
        %v829 = vunpack.c.h.b16 %v749
        %v830 = vunpack.c.l.b16 %v750
        %v831 = vunpack.c.h.b16 %v750
        %v832 = vunpack.c.l.b16 %v751
        %v833 = vunpack.c.h.b16 %v751
        %v834 = vunpack.c.l.b16 %v752
        %v835 = vunpack.c.h.b16 %v752
        %v836 = vunpack.c.l.b16 %v753
        %v837 = vunpack.c.h.b16 %v753
        %v838 = vunpack.c.l.b16 %v754
        %v839 = vunpack.c.h.b16 %v754
        %v840 = vunpack.c.l.b16 %v755
        %v841 = vunpack.c.h.b16 %v755
        %v842 = vunpack.c.l.b16 %v756
        %v843 = vunpack.c.h.b16 %v756
        %v844 = vunpack.c.l.b16 %v757
        %v845 = vunpack.c.h.b16 %v757
        %v846 = vunpack.c.l.b16 %v758
        %v847 = vunpack.c.h.b16 %v758
        %v848 = vunpack.c.l.b16 %v759
        %v849 = vunpack.c.h.b16 %v759
        %v850 = vunpack.c.l.b16 %v760
        %v851 = vunpack.c.h.b16 %v760
        %v852 = vunpack.c.l.b16 %v761
        %v853 = vunpack.c.h.b16 %v761
        %v854 = vunpack.c.l.b16 %v762
        %v855 = vunpack.c.h.b16 %v762
        %v856 = vunpack.c.l.b16 %v763
        %v857 = vunpack.c.h.b16 %v763
        %v858 = vunpack.c.l.b16 %v764
        %v859 = vunpack.c.h.b16 %v764
        %v860 = vunpack.c.l.b16 %v765
        %v861 = vunpack.c.h.b16 %v765
        %v862 = vunpack.c.l.b16 %v766
        %v863 = vunpack.c.h.b16 %v766
        %v864 = vunpack.c.l.b16 %v767
        %v865 = vunpack.c.h.b16 %v767
        %v866 = vunpack.c.l.b16 %v768
        %v867 = vunpack.c.h.b16 %v768
        %v868 = vunpack.c.l.b16 %v769
        %v869 = vunpack.c.h.b16 %v769
        %v870 = vunpack.c.l.b16 %v770
        %v871 = vunpack.c.h.b16 %v770
        %v872 = vunpack.c.l.b16 %v771
        %v873 = vunpack.c.h.b16 %v771
        %v874 = vunpack.c.l.b16 %v772
        %v875 = vunpack.c.h.b16 %v772
        %v876 = vunpack.c.l.b16 %v773
        %v877 = vunpack.c.h.b16 %v773
        %v878 = vunpack.c.l.b16 %v774
        %v879 = vunpack.c.h.b16 %v774
        %v880 = vunpack.c.l.b16 %v775
        %v881 = vunpack.c.h.b16 %v775
        %v882 = vunpack.c.l.b16 %v776
        %v883 = vunpack.c.h.b16 %v776
        %v884 = vunpack.c.l.b16 %v777
        %v885 = vunpack.c.h.b16 %v777
        %v886 = vunpack.c.l.b16 %v778
        %v887 = vunpack.c.h.b16 %v778
        %v888 = vpack.c.b16 %v826, %v824
        %v889 = vpack.c.b16 %v827, %v825
        %v890 = vpack.c.b16 %v830, %v828
        %v891 = vpack.c.b16 %v831, %v829
        %v892 = vpack.c.b16 %v834, %v832
        %v893 = vpack.c.b16 %v835, %v833
        %v894 = vpack.c.b16 %v838, %v836
        %v895 = vpack.c.b16 %v839, %v837
        %v896 = vpack.c.b16 %v842, %v840
        %v897 = vpack.c.b16 %v843, %v841
        %v898 = vpack.c.b16 %v846, %v844
        %v899 = vpack.c.b16 %v847, %v845
        %v900 = vpack.c.b16 %v850, %v848
        %v901 = vpack.c.b16 %v851, %v849
        %v902 = vpack.c.b16 %v854, %v852
        %v903 = vpack.c.b16 %v855, %v853
        %v904 = vpack.c.b16 %v858, %v856
        %v905 = vpack.c.b16 %v859, %v857
        %v906 = vpack.c.b16 %v862, %v860
        %v907 = vpack.c.b16 %v863, %v861
        %v908 = vpack.c.b16 %v866, %v864
        %v909 = vpack.c.b16 %v867, %v865
        %v910 = vpack.c.b16 %v870, %v868
        %v911 = vpack.c.b16 %v871, %v869
        %v912 = vpack.c.b16 %v874, %v872
        %v913 = vpack.c.b16 %v875, %v873
        %v914 = vpack.c.b16 %v878, %v876
        %v915 = vpack.c.b16 %v879, %v877
        %v916 = vpack.c.b16 %v882, %v880
        %v917 = vpack.c.b16 %v883, %v881
        %v918 = vpack.c.b16 %v886, %v884
        %v919 = vpack.c.b16 %v887, %v885
        %952 = vmatpush.bf16.msra.mxu0 %v902
        %953 = vmatpush.bf16.msra.mxu0 %v900
        %954 = vmatpush.bf16.msra.mxu0 %v898
        %955 = vmatpush.bf16.msra.mxu0 %v896
        %956 = vmatpush.bf16.msra.mxu0 %v894
        %957 = vmatpush.bf16.msra.mxu0 %v892
        %958 = vmatpush.bf16.msra.mxu0 %v890
        %959 = vmatpush.bf16.msra.mxu0 %v888
        %960 = vmatmul.bf16.gmra.mxu0 %v786
        %v961 = vpop.f32.mrf.mxu0
        %v962 = vadd.f32 0.0, %v961
        %v963 = vpop.f32.mrf.mxu0
        %v964 = vadd.f32 0.0, %v963
        %965 = vdwg.mxu0
        %966 = vmatpush.bf16.msra.mxu0 %v918
        %967 = vmatpush.bf16.msra.mxu0 %v916
        %968 = vmatpush.bf16.msra.mxu0 %v914
        %969 = vmatpush.bf16.msra.mxu0 %v912
        %970 = vmatpush.bf16.msra.mxu0 %v910
        %971 = vmatpush.bf16.msra.mxu0 %v908
        %972 = vmatpush.bf16.msra.mxu0 %v906
        %973 = vmatpush.bf16.msra.mxu0 %v904
        %974 = vmatmul.bf16.gmra.mxu0 %v789
        %v975 = vpop.f32.mrf.mxu0
        %v976 = vadd.f32 %v962, %v975
        %v977 = vpop.f32.mrf.mxu0
        %v978 = vadd.f32 %v964, %v977
        %979 = vdwg.mxu0
        %980 = vmatpush.bf16.msra.mxu0 %v903
        %981 = vmatpush.bf16.msra.mxu0 %v901
        %982 = vmatpush.bf16.msra.mxu0 %v899
        %983 = vmatpush.bf16.msra.mxu0 %v897
        %984 = vmatpush.bf16.msra.mxu0 %v895
        %985 = vmatpush.bf16.msra.mxu0 %v893
        %986 = vmatpush.bf16.msra.mxu0 %v891
        %987 = vmatpush.bf16.msra.mxu0 %v889
        %988 = vmatmul.bf16.gmra.mxu0 %v786
        %v989 = vpop.f32.mrf.mxu0
        %v990 = vadd.f32 0.0, %v989
        %v991 = vpop.f32.mrf.mxu0
        %v992 = vadd.f32 0.0, %v991
        %993 = vdwg.mxu0
        %994 = vmatpush.bf16.msra.mxu0 %v919
        %995 = vmatpush.bf16.msra.mxu0 %v917
        %996 = vmatpush.bf16.msra.mxu0 %v915
        %997 = vmatpush.bf16.msra.mxu0 %v913
        %998 = vmatpush.bf16.msra.mxu0 %v911
        %999 = vmatpush.bf16.msra.mxu0 %v909
        %1000 = vmatpush.bf16.msra.mxu0 %v907
        %1001 = vmatpush.bf16.msra.mxu0 %v905
        %1002 = vmatmul.bf16.gmra.mxu0 %v789
        %v1003 = vpop.f32.mrf.mxu0
        %v1004 = vadd.f32 %v990, %v1003
        %v1005 = vpop.f32.mrf.mxu0
        %v1006 = vadd.f32 %v992, %v1005
        %1007 = vdwg.mxu0
        %v1008 = vadd.f32 %v706, %v976
        %v1009 = vadd.f32 %v734, %v1004
        %v1010 = vadd.f32 %v708, %v978
        %v1011 = vadd.f32 %v736, %v1006
        %v1012 = vld [vmem:[#allocation2] sm:$0xf8]
        %v1013 = vld [vmem:[#allocation2 + $0x8] sm:$0xf8]
        %v1014 = vld [vmem:[#allocation2 + $0x20] sm:$0x7]
        %v1015 = vld [vmem:[#allocation2 + $0x28] sm:$0x7]
        %v1016 = vpack.c.bf16 %v202, %v1012
        %v1017 = vpack.c.bf16 %v203, %v1013
        %v1018 = vpack.c.bf16 %v1014, %v1014
        %v1019 = vpack.c.bf16 %v1015, %v1015
        %s1020 = scalar_lea.vmem [#allocation3], 768
        %v1021 = vld [vmem:[%s1020] sm:$0xff]
        %v1022 = vld [vmem:[%s1020 + $0x8] sm:$0xff]
        %v1023 = vld [vmem:[%s1020 + $0x10] sm:$0xff]
        %v1024 = vld [vmem:[%s1020 + $0x18] sm:$0xff]
        %v1025 = vld [vmem:[%s1020 + $0x20] sm:$0xff]
        %v1026 = vld [vmem:[%s1020 + $0x28] sm:$0xff]
        %v1027 = vld [vmem:[%s1020 + $0x30] sm:$0xff]
        %v1028 = vld [vmem:[%s1020 + $0x38] sm:$0xff]
        %v1029 = vld [vmem:[%s1020 + $0x40] sm:$0xff]
        %v1030 = vld [vmem:[%s1020 + $0x48] sm:$0xff]
        %v1031 = vld [vmem:[%s1020 + $0x50] sm:$0xff]
        %v1032 = vld [vmem:[%s1020 + $0x58] sm:$0xff]
        %v1033 = vld [vmem:[%s1020 + $0x60] sm:$0xff]
        %v1034 = vld [vmem:[%s1020 + $0x68] sm:$0xff]
        %v1035 = vld [vmem:[%s1020 + $0x70] sm:$0xff]
        %v1036 = vld [vmem:[%s1020 + $0x78] sm:$0xff]
        %v1037 = vld [vmem:[%s1020 + $0x80] sm:$0xff]
        %v1038 = vld [vmem:[%s1020 + $0x88] sm:$0xff]
        %v1039 = vld [vmem:[%s1020 + $0x90] sm:$0xff]
        %v1040 = vld [vmem:[%s1020 + $0x98] sm:$0xff]
        %v1041 = vld [vmem:[%s1020 + $0xa0] sm:$0xff]
        %v1042 = vld [vmem:[%s1020 + $0xa8] sm:$0xff]
        %v1043 = vld [vmem:[%s1020 + $0xb0] sm:$0xff]
        %v1044 = vld [vmem:[%s1020 + $0xb8] sm:$0xff]
        %v1045 = vld [vmem:[%s1020 + $0xc0] sm:$0xff]
        %v1046 = vld [vmem:[%s1020 + $0xc8] sm:$0xff]
        %v1047 = vld [vmem:[%s1020 + $0xd0] sm:$0xff]
        %v1048 = vld [vmem:[%s1020 + $0xd8] sm:$0xff]
        %v1049 = vld [vmem:[%s1020 + $0xe0] sm:$0xff]
        %v1050 = vld [vmem:[%s1020 + $0xe8] sm:$0xff]
        %v1051 = vld [vmem:[%s1020 + $0xf0] sm:$0xff]
        %v1052 = vld [vmem:[%s1020 + $0xf8] sm:$0xff]
        %vm1053 = vsmask.f32 6400
        %v1055 = vshrl.u32 %v1016, 16
        %v1057 = vrot.slane %v1055, 1
        %v1058 = vshll.u32 %v1016, 16
        %v1060 = vrot.slane %v1058, 2
        %v1061 = vor.u32 %v1057, %v1060
        %v1063 = vshrl.u32 %v1018, 16
        %v1065 = vrot.slane %v1063, 1
        %v1066 = vshll.u32 %v1018, 16
        %v1068 = vrot.slane %v1066, 2
        %v1069 = vor.u32 %v1065, %v1068
        %v1070 = vsel %vm1053, %v1061, %v1069
        %v1072 = vshrl.u32 %v1017, 16
        %v1074 = vrot.slane %v1072, 1
        %v1075 = vshll.u32 %v1017, 16
        %v1077 = vrot.slane %v1075, 2
        %v1078 = vor.u32 %v1074, %v1077
        %v1080 = vshrl.u32 %v1019, 16
        %v1082 = vrot.slane %v1080, 1
        %v1083 = vshll.u32 %v1019, 16
        %v1085 = vrot.slane %v1083, 2
        %v1086 = vor.u32 %v1082, %v1085
        %v1087 = vsel %vm1053, %v1078, %v1086
        %v1122 = vunpack.c.l.b16 %v1021
        %v1123 = vunpack.c.h.b16 %v1021
        %v1124 = vunpack.c.l.b16 %v1022
        %v1125 = vunpack.c.h.b16 %v1022
        %v1126 = vunpack.c.l.b16 %v1023
        %v1127 = vunpack.c.h.b16 %v1023
        %v1128 = vunpack.c.l.b16 %v1024
        %v1129 = vunpack.c.h.b16 %v1024
        %v1130 = vunpack.c.l.b16 %v1025
        %v1131 = vunpack.c.h.b16 %v1025
        %v1132 = vunpack.c.l.b16 %v1026
        %v1133 = vunpack.c.h.b16 %v1026
        %v1134 = vunpack.c.l.b16 %v1027
        %v1135 = vunpack.c.h.b16 %v1027
        %v1136 = vunpack.c.l.b16 %v1028
        %v1137 = vunpack.c.h.b16 %v1028
        %v1138 = vunpack.c.l.b16 %v1029
        %v1139 = vunpack.c.h.b16 %v1029
        %v1140 = vunpack.c.l.b16 %v1030
        %v1141 = vunpack.c.h.b16 %v1030
        %v1142 = vunpack.c.l.b16 %v1031
        %v1143 = vunpack.c.h.b16 %v1031
        %v1144 = vunpack.c.l.b16 %v1032
        %v1145 = vunpack.c.h.b16 %v1032
        %v1146 = vunpack.c.l.b16 %v1033
        %v1147 = vunpack.c.h.b16 %v1033
        %v1148 = vunpack.c.l.b16 %v1034
        %v1149 = vunpack.c.h.b16 %v1034
        %v1150 = vunpack.c.l.b16 %v1035
        %v1151 = vunpack.c.h.b16 %v1035
        %v1152 = vunpack.c.l.b16 %v1036
        %v1153 = vunpack.c.h.b16 %v1036
        %v1154 = vunpack.c.l.b16 %v1037
        %v1155 = vunpack.c.h.b16 %v1037
        %v1156 = vunpack.c.l.b16 %v1038
        %v1157 = vunpack.c.h.b16 %v1038
        %v1158 = vunpack.c.l.b16 %v1039
        %v1159 = vunpack.c.h.b16 %v1039
        %v1160 = vunpack.c.l.b16 %v1040
        %v1161 = vunpack.c.h.b16 %v1040
        %v1162 = vunpack.c.l.b16 %v1041
        %v1163 = vunpack.c.h.b16 %v1041
        %v1164 = vunpack.c.l.b16 %v1042
        %v1165 = vunpack.c.h.b16 %v1042
        %v1166 = vunpack.c.l.b16 %v1043
        %v1167 = vunpack.c.h.b16 %v1043
        %v1168 = vunpack.c.l.b16 %v1044
        %v1169 = vunpack.c.h.b16 %v1044
        %v1170 = vunpack.c.l.b16 %v1045
        %v1171 = vunpack.c.h.b16 %v1045
        %v1172 = vunpack.c.l.b16 %v1046
        %v1173 = vunpack.c.h.b16 %v1046
        %v1174 = vunpack.c.l.b16 %v1047
        %v1175 = vunpack.c.h.b16 %v1047
        %v1176 = vunpack.c.l.b16 %v1048
        %v1177 = vunpack.c.h.b16 %v1048
        %v1178 = vunpack.c.l.b16 %v1049
        %v1179 = vunpack.c.h.b16 %v1049
        %v1180 = vunpack.c.l.b16 %v1050
        %v1181 = vunpack.c.h.b16 %v1050
        %v1182 = vunpack.c.l.b16 %v1051
        %v1183 = vunpack.c.h.b16 %v1051
        %v1184 = vunpack.c.l.b16 %v1052
        %v1185 = vunpack.c.h.b16 %v1052
        %v1186 = vpack.c.b16 %v1124, %v1122
        %v1187 = vpack.c.b16 %v1125, %v1123
        %v1188 = vpack.c.b16 %v1128, %v1126
        %v1189 = vpack.c.b16 %v1129, %v1127
        %v1190 = vpack.c.b16 %v1132, %v1130
        %v1191 = vpack.c.b16 %v1133, %v1131
        %v1192 = vpack.c.b16 %v1136, %v1134
        %v1193 = vpack.c.b16 %v1137, %v1135
        %v1194 = vpack.c.b16 %v1140, %v1138
        %v1195 = vpack.c.b16 %v1141, %v1139
        %v1196 = vpack.c.b16 %v1144, %v1142
        %v1197 = vpack.c.b16 %v1145, %v1143
        %v1198 = vpack.c.b16 %v1148, %v1146
        %v1199 = vpack.c.b16 %v1149, %v1147
        %v1200 = vpack.c.b16 %v1152, %v1150
        %v1201 = vpack.c.b16 %v1153, %v1151
        %v1202 = vpack.c.b16 %v1156, %v1154
        %v1203 = vpack.c.b16 %v1157, %v1155
        %v1204 = vpack.c.b16 %v1160, %v1158
        %v1205 = vpack.c.b16 %v1161, %v1159
        %v1206 = vpack.c.b16 %v1164, %v1162
        %v1207 = vpack.c.b16 %v1165, %v1163
        %v1208 = vpack.c.b16 %v1168, %v1166
        %v1209 = vpack.c.b16 %v1169, %v1167
        %v1210 = vpack.c.b16 %v1172, %v1170
        %v1211 = vpack.c.b16 %v1173, %v1171
        %v1212 = vpack.c.b16 %v1176, %v1174
        %v1213 = vpack.c.b16 %v1177, %v1175
        %v1214 = vpack.c.b16 %v1180, %v1178
        %v1215 = vpack.c.b16 %v1181, %v1179
        %v1216 = vpack.c.b16 %v1184, %v1182
        %v1217 = vpack.c.b16 %v1185, %v1183
        %1250 = vmatpush.bf16.msra.mxu0 %v1200
        %1251 = vmatpush.bf16.msra.mxu0 %v1198
        %1252 = vmatpush.bf16.msra.mxu0 %v1196
        %1253 = vmatpush.bf16.msra.mxu0 %v1194
        %1254 = vmatpush.bf16.msra.mxu0 %v1192
        %1255 = vmatpush.bf16.msra.mxu0 %v1190
        %1256 = vmatpush.bf16.msra.mxu0 %v1188
        %1257 = vmatpush.bf16.msra.mxu0 %v1186
        %1258 = vmatmul.bf16.gmra.mxu0 %v1070
        %v1259 = vpop.f32.mrf.mxu0
        %v1260 = vadd.f32 0.0, %v1259
        %v1261 = vpop.f32.mrf.mxu0
        %v1262 = vadd.f32 0.0, %v1261
        %1263 = vdwg.mxu0
        %1264 = vmatpush.bf16.msra.mxu0 %v1216
        %1265 = vmatpush.bf16.msra.mxu0 %v1214
        %1266 = vmatpush.bf16.msra.mxu0 %v1212
        %1267 = vmatpush.bf16.msra.mxu0 %v1210
        %1268 = vmatpush.bf16.msra.mxu0 %v1208
        %1269 = vmatpush.bf16.msra.mxu0 %v1206
        %1270 = vmatpush.bf16.msra.mxu0 %v1204
        %1271 = vmatpush.bf16.msra.mxu0 %v1202
        %1272 = vmatmul.bf16.gmra.mxu0 %v1087
        %v1273 = vpop.f32.mrf.mxu0
        %v1274 = vadd.f32 %v1260, %v1273
        %v1275 = vpop.f32.mrf.mxu0
        %v1276 = vadd.f32 %v1262, %v1275
        %1277 = vdwg.mxu0
        %1278 = vmatpush.bf16.msra.mxu0 %v1201
        %1279 = vmatpush.bf16.msra.mxu0 %v1199
        %1280 = vmatpush.bf16.msra.mxu0 %v1197
        %1281 = vmatpush.bf16.msra.mxu0 %v1195
        %1282 = vmatpush.bf16.msra.mxu0 %v1193
        %1283 = vmatpush.bf16.msra.mxu0 %v1191
        %1284 = vmatpush.bf16.msra.mxu0 %v1189
        %1285 = vmatpush.bf16.msra.mxu0 %v1187
        %1286 = vmatmul.bf16.gmra.mxu0 %v1070
        %v1287 = vpop.f32.mrf.mxu0
        %v1288 = vadd.f32 0.0, %v1287
        %v1289 = vpop.f32.mrf.mxu0
        %v1290 = vadd.f32 0.0, %v1289
        %1291 = vdwg.mxu0
        %1292 = vmatpush.bf16.msra.mxu0 %v1217
        %1293 = vmatpush.bf16.msra.mxu0 %v1215
        %1294 = vmatpush.bf16.msra.mxu0 %v1213
        %1295 = vmatpush.bf16.msra.mxu0 %v1211
        %1296 = vmatpush.bf16.msra.mxu0 %v1209
        %1297 = vmatpush.bf16.msra.mxu0 %v1207
        %1298 = vmatpush.bf16.msra.mxu0 %v1205
        %1299 = vmatpush.bf16.msra.mxu0 %v1203
        %1300 = vmatmul.bf16.gmra.mxu0 %v1087
        %v1301 = vpop.f32.mrf.mxu0
        %v1302 = vadd.f32 %v1288, %v1301
        %v1303 = vpop.f32.mrf.mxu0
        %v1304 = vadd.f32 %v1290, %v1303
        %1305 = vdwg.mxu0
        %v1306 = vadd.f32 %v1008, %v1274
        %v1307 = vadd.f32 %v1009, %v1302
        %v1308 = vadd.f32 %v1010, %v1276
        %v1309 = vadd.f32 %v1011, %v1304
        %v1310 = vld [vmem:[#allocation2] sm:$0xf0]
        %v1311 = vld [vmem:[#allocation2 + $0x8] sm:$0xf0]
        %v1312 = vld [vmem:[#allocation2 + $0x20] sm:$0xf]
        %v1313 = vld [vmem:[#allocation2 + $0x28] sm:$0xf]
        %v1314 = vpack.c.bf16 %v202, %v1310
        %v1315 = vpack.c.bf16 %v203, %v1311
        %v1316 = vpack.c.bf16 %v1312, %v1312
        %v1317 = vpack.c.bf16 %v1313, %v1313
        %s1318 = scalar_lea.vmem [#allocation3], 1024
        %v1319 = vld [vmem:[%s1318] sm:$0xff]
        %v1320 = vld [vmem:[%s1318 + $0x8] sm:$0xff]
        %v1321 = vld [vmem:[%s1318 + $0x10] sm:$0xff]
        %v1322 = vld [vmem:[%s1318 + $0x18] sm:$0xff]
        %v1323 = vld [vmem:[%s1318 + $0x20] sm:$0xff]
        %v1324 = vld [vmem:[%s1318 + $0x28] sm:$0xff]
        %v1325 = vld [vmem:[%s1318 + $0x30] sm:$0xff]
        %v1326 = vld [vmem:[%s1318 + $0x38] sm:$0xff]
        %v1327 = vld [vmem:[%s1318 + $0x40] sm:$0xff]
        %v1328 = vld [vmem:[%s1318 + $0x48] sm:$0xff]
        %v1329 = vld [vmem:[%s1318 + $0x50] sm:$0xff]
        %v1330 = vld [vmem:[%s1318 + $0x58] sm:$0xff]
        %v1331 = vld [vmem:[%s1318 + $0x60] sm:$0xff]
        %v1332 = vld [vmem:[%s1318 + $0x68] sm:$0xff]
        %v1333 = vld [vmem:[%s1318 + $0x70] sm:$0xff]
        %v1334 = vld [vmem:[%s1318 + $0x78] sm:$0xff]
        %v1335 = vld [vmem:[%s1318 + $0x80] sm:$0xff]
        %v1336 = vld [vmem:[%s1318 + $0x88] sm:$0xff]
        %v1337 = vld [vmem:[%s1318 + $0x90] sm:$0xff]
        %v1338 = vld [vmem:[%s1318 + $0x98] sm:$0xff]
        %v1339 = vld [vmem:[%s1318 + $0xa0] sm:$0xff]
        %v1340 = vld [vmem:[%s1318 + $0xa8] sm:$0xff]
        %v1341 = vld [vmem:[%s1318 + $0xb0] sm:$0xff]
        %v1342 = vld [vmem:[%s1318 + $0xb8] sm:$0xff]
        %v1343 = vld [vmem:[%s1318 + $0xc0] sm:$0xff]
        %v1344 = vld [vmem:[%s1318 + $0xc8] sm:$0xff]
        %v1345 = vld [vmem:[%s1318 + $0xd0] sm:$0xff]
        %v1346 = vld [vmem:[%s1318 + $0xd8] sm:$0xff]
        %v1347 = vld [vmem:[%s1318 + $0xe0] sm:$0xff]
        %v1348 = vld [vmem:[%s1318 + $0xe8] sm:$0xff]
        %v1349 = vld [vmem:[%s1318 + $0xf0] sm:$0xff]
        %v1350 = vld [vmem:[%s1318 + $0xf8] sm:$0xff]
        %vm1355 = vcmask 1045504
        %v1356 = vrot.slane %v1314, 2
        %v1357 = vrot.slane %v1316, 2
        %v1358 = vsel %vm1355, %v1356, %v1357
        %v1359 = vrot.slane %v1315, 2
        %v1360 = vrot.slane %v1317, 2
        %v1361 = vsel %vm1355, %v1359, %v1360
        %v1396 = vunpack.c.l.b16 %v1319
        %v1397 = vunpack.c.h.b16 %v1319
        %v1398 = vunpack.c.l.b16 %v1320
        %v1399 = vunpack.c.h.b16 %v1320
        %v1400 = vunpack.c.l.b16 %v1321
        %v1401 = vunpack.c.h.b16 %v1321
        %v1402 = vunpack.c.l.b16 %v1322
        %v1403 = vunpack.c.h.b16 %v1322
        %v1404 = vunpack.c.l.b16 %v1323
        %v1405 = vunpack.c.h.b16 %v1323
        %v1406 = vunpack.c.l.b16 %v1324
        %v1407 = vunpack.c.h.b16 %v1324
        %v1408 = vunpack.c.l.b16 %v1325
        %v1409 = vunpack.c.h.b16 %v1325
        %v1410 = vunpack.c.l.b16 %v1326
        %v1411 = vunpack.c.h.b16 %v1326
        %v1412 = vunpack.c.l.b16 %v1327
        %v1413 = vunpack.c.h.b16 %v1327
        %v1414 = vunpack.c.l.b16 %v1328
        %v1415 = vunpack.c.h.b16 %v1328
        %v1416 = vunpack.c.l.b16 %v1329
        %v1417 = vunpack.c.h.b16 %v1329
        %v1418 = vunpack.c.l.b16 %v1330
        %v1419 = vunpack.c.h.b16 %v1330
        %v1420 = vunpack.c.l.b16 %v1331
        %v1421 = vunpack.c.h.b16 %v1331
        %v1422 = vunpack.c.l.b16 %v1332
        %v1423 = vunpack.c.h.b16 %v1332
        %v1424 = vunpack.c.l.b16 %v1333
        %v1425 = vunpack.c.h.b16 %v1333
        %v1426 = vunpack.c.l.b16 %v1334
        %v1427 = vunpack.c.h.b16 %v1334
        %v1428 = vunpack.c.l.b16 %v1335
        %v1429 = vunpack.c.h.b16 %v1335
        %v1430 = vunpack.c.l.b16 %v1336
        %v1431 = vunpack.c.h.b16 %v1336
        %v1432 = vunpack.c.l.b16 %v1337
        %v1433 = vunpack.c.h.b16 %v1337
        %v1434 = vunpack.c.l.b16 %v1338
        %v1435 = vunpack.c.h.b16 %v1338
        %v1436 = vunpack.c.l.b16 %v1339
        %v1437 = vunpack.c.h.b16 %v1339
        %v1438 = vunpack.c.l.b16 %v1340
        %v1439 = vunpack.c.h.b16 %v1340
        %v1440 = vunpack.c.l.b16 %v1341
        %v1441 = vunpack.c.h.b16 %v1341
        %v1442 = vunpack.c.l.b16 %v1342
        %v1443 = vunpack.c.h.b16 %v1342
        %v1444 = vunpack.c.l.b16 %v1343
        %v1445 = vunpack.c.h.b16 %v1343
        %v1446 = vunpack.c.l.b16 %v1344
        %v1447 = vunpack.c.h.b16 %v1344
        %v1448 = vunpack.c.l.b16 %v1345
        %v1449 = vunpack.c.h.b16 %v1345
        %v1450 = vunpack.c.l.b16 %v1346
        %v1451 = vunpack.c.h.b16 %v1346
        %v1452 = vunpack.c.l.b16 %v1347
        %v1453 = vunpack.c.h.b16 %v1347
        %v1454 = vunpack.c.l.b16 %v1348
        %v1455 = vunpack.c.h.b16 %v1348
        %v1456 = vunpack.c.l.b16 %v1349
        %v1457 = vunpack.c.h.b16 %v1349
        %v1458 = vunpack.c.l.b16 %v1350
        %v1459 = vunpack.c.h.b16 %v1350
        %v1460 = vpack.c.b16 %v1398, %v1396
        %v1461 = vpack.c.b16 %v1399, %v1397
        %v1462 = vpack.c.b16 %v1402, %v1400
        %v1463 = vpack.c.b16 %v1403, %v1401
        %v1464 = vpack.c.b16 %v1406, %v1404
        %v1465 = vpack.c.b16 %v1407, %v1405
        %v1466 = vpack.c.b16 %v1410, %v1408
        %v1467 = vpack.c.b16 %v1411, %v1409
        %v1468 = vpack.c.b16 %v1414, %v1412
        %v1469 = vpack.c.b16 %v1415, %v1413
        %v1470 = vpack.c.b16 %v1418, %v1416
        %v1471 = vpack.c.b16 %v1419, %v1417
        %v1472 = vpack.c.b16 %v1422, %v1420
        %v1473 = vpack.c.b16 %v1423, %v1421
        %v1474 = vpack.c.b16 %v1426, %v1424
        %v1475 = vpack.c.b16 %v1427, %v1425
        %v1476 = vpack.c.b16 %v1430, %v1428
        %v1477 = vpack.c.b16 %v1431, %v1429
        %v1478 = vpack.c.b16 %v1434, %v1432
        %v1479 = vpack.c.b16 %v1435, %v1433
        %v1480 = vpack.c.b16 %v1438, %v1436
        %v1481 = vpack.c.b16 %v1439, %v1437
        %v1482 = vpack.c.b16 %v1442, %v1440
        %v1483 = vpack.c.b16 %v1443, %v1441
        %v1484 = vpack.c.b16 %v1446, %v1444
        %v1485 = vpack.c.b16 %v1447, %v1445
        %v1486 = vpack.c.b16 %v1450, %v1448
        %v1487 = vpack.c.b16 %v1451, %v1449
        %v1488 = vpack.c.b16 %v1454, %v1452
        %v1489 = vpack.c.b16 %v1455, %v1453
        %v1490 = vpack.c.b16 %v1458, %v1456
        %v1491 = vpack.c.b16 %v1459, %v1457
        %1524 = vmatpush.bf16.msra.mxu0 %v1474
        %1525 = vmatpush.bf16.msra.mxu0 %v1472
        %1526 = vmatpush.bf16.msra.mxu0 %v1470
        %1527 = vmatpush.bf16.msra.mxu0 %v1468
        %1528 = vmatpush.bf16.msra.mxu0 %v1466
        %1529 = vmatpush.bf16.msra.mxu0 %v1464
        %1530 = vmatpush.bf16.msra.mxu0 %v1462
        %1531 = vmatpush.bf16.msra.mxu0 %v1460
        %1532 = vmatmul.bf16.gmra.mxu0 %v1358
        %v1533 = vpop.f32.mrf.mxu0
        %v1534 = vadd.f32 0.0, %v1533
        %v1535 = vpop.f32.mrf.mxu0
        %v1536 = vadd.f32 0.0, %v1535
        %1537 = vdwg.mxu0
        %1538 = vmatpush.bf16.msra.mxu0 %v1490
        %1539 = vmatpush.bf16.msra.mxu0 %v1488
        %1540 = vmatpush.bf16.msra.mxu0 %v1486
        %1541 = vmatpush.bf16.msra.mxu0 %v1484
        %1542 = vmatpush.bf16.msra.mxu0 %v1482
        %1543 = vmatpush.bf16.msra.mxu0 %v1480
        %1544 = vmatpush.bf16.msra.mxu0 %v1478
        %1545 = vmatpush.bf16.msra.mxu0 %v1476
        %1546 = vmatmul.bf16.gmra.mxu0 %v1361
        %v1547 = vpop.f32.mrf.mxu0
        %v1548 = vadd.f32 %v1534, %v1547
        %v1549 = vpop.f32.mrf.mxu0
        %v1550 = vadd.f32 %v1536, %v1549
        %1551 = vdwg.mxu0
        %1552 = vmatpush.bf16.msra.mxu0 %v1475
        %1553 = vmatpush.bf16.msra.mxu0 %v1473
        %1554 = vmatpush.bf16.msra.mxu0 %v1471
        %1555 = vmatpush.bf16.msra.mxu0 %v1469
        %1556 = vmatpush.bf16.msra.mxu0 %v1467
        %1557 = vmatpush.bf16.msra.mxu0 %v1465
        %1558 = vmatpush.bf16.msra.mxu0 %v1463
        %1559 = vmatpush.bf16.msra.mxu0 %v1461
        %1560 = vmatmul.bf16.gmra.mxu0 %v1358
        %v1561 = vpop.f32.mrf.mxu0
        %v1562 = vadd.f32 0.0, %v1561
        %v1563 = vpop.f32.mrf.mxu0
        %v1564 = vadd.f32 0.0, %v1563
        %1565 = vdwg.mxu0
        %1566 = vmatpush.bf16.msra.mxu0 %v1491
        %1567 = vmatpush.bf16.msra.mxu0 %v1489
        %1568 = vmatpush.bf16.msra.mxu0 %v1487
        %1569 = vmatpush.bf16.msra.mxu0 %v1485
        %1570 = vmatpush.bf16.msra.mxu0 %v1483
        %1571 = vmatpush.bf16.msra.mxu0 %v1481
        %1572 = vmatpush.bf16.msra.mxu0 %v1479
        %1573 = vmatpush.bf16.msra.mxu0 %v1477
        %1574 = vmatmul.bf16.gmra.mxu0 %v1361
        %v1575 = vpop.f32.mrf.mxu0
        %v1576 = vadd.f32 %v1562, %v1575
        %v1577 = vpop.f32.mrf.mxu0
        %v1578 = vadd.f32 %v1564, %v1577
        %1579 = vdwg.mxu0
        %v1580 = vadd.f32 %v1306, %v1548
        %v1581 = vadd.f32 %v1307, %v1576
        %v1582 = vadd.f32 %v1308, %v1550
        %v1583 = vadd.f32 %v1309, %v1578
        %1584 = vst [vmem:[%s160] sm:$0xff] %v1580
        %1585 = vst [vmem:[%s160 + $0x8] sm:$0xff] %v1581
        %1586 = vst [vmem:[%s160 + $0x10] sm:$0xff] %v1582
        %1587 = vst [vmem:[%s160 + $0x18] sm:$0xff] %v1583
        %p1588 = scmp.lt.s32.totalorder %s14, 1
        %s1589 = scalar_select %p1588, %s14, 1
        %s1590 = smul.addr %s1589, 4
        %s1591 = smul.addr %s1590, 8
        %s1592 = scalar_lea.vmem %s2, %s1591
        // Predicated region
        $region33: #{hermite_conv2d.1} parent=27 // pred_check
          %p1593 = pneg %p79
        $region34: #{hermite_conv2d.1} parent=27 // pred_check_branch
          %1595 = sbr.rel (%p1593) target = $region36
        $region35: #{hermite_conv2d.1} parent=27 // pred_region
          _
        $region36: #{hermite_conv2d.1} parent=27 // pred_fallthru
          _
      $region28: #{hermite_conv2d.1} parent=5 // pred_fallthru
        _
      %p1596 = scmp.le.s32.totalorder 2, %s9
      // Predicated region
      $region37: #{hermite_conv2d.1} parent=5 // pred_check
        %p1597 = pneg %p1596
      $region38: #{hermite_conv2d.1} parent=5 // pred_check_branch
        %1599 = sbr.rel (%p1597) target = $region40
      $region39: #{hermite_conv2d.1} parent=5 // pred_region
        %s1600 = ssub.s32 %s9, 2
        // Predicated region
        $region41: #{hermite_conv2d.1} parent=39 // pred_check
          %p1601 = pneg %p85
        $region42: #{hermite_conv2d.1} parent=39 // pred_check_branch
          %1603 = sbr.rel (%p1601) target = $region44
        $region43: #{hermite_conv2d.1} parent=39 // pred_region
          %p1604 = scmp.lt.s32.totalorder %s15, 1
          %s1605 = scalar_select %p1604, %s15, 1
          %s1606 = smul.addr %s1605, 4
          %s1607 = smul.addr %s1606, 8
          %s1608 = scalar_lea.vmem %s2, %s1607
        $region44: #{hermite_conv2d.1} parent=39 // pred_fallthru
          _
      $region40: #{hermite_conv2d.1} parent=5 // pred_fallthru
        _
    $region6: #{hermite_conv2d.1} parent=1 // loop_footer
      %s13 = sadd.s32 1, %s9
    $region7: #{hermite_conv2d.1} parent=1 // loop_footer_branch
      %8 = sbr.rel target = $region3
    $region8: #{hermite_conv2d.1} parent=1 // loop_exit
      _
    %1609 = vsyncpa [#allocation4], 1
    %s1610 = scalar_lea.sflag [#allocation4], 1
    %1611 = vsyncpa %s1610, 1

</llo_original>
